<compile_context>
chip_gen: v6e
topology: v6e:2x2x1
jax: 0.10.0
libtpu: 0.0.40
codegen_flags: <defaults>
</compile_context>

<pallas_src>
import functools

import jax
import jax.numpy as jnp
from jax.experimental import pallas as pl
from jax.experimental.pallas import tpu as pltpu


# ------------------------------ router kernel -------------------------------

def _router_kernel(x_ref, w_ref, o_ref):
    # (tT, H) @ (H, Ep) -> (tT, Ep) f32; Ep is a multiple of 128 so the store
    # is lane-dense (unmasked vst).
    o_ref[...] = jnp.dot(x_ref[...], w_ref[...],
                         preferred_element_type=jnp.float32)


def router_logits_pallas(x, gate_w):
    T, H = x.shape
    E = gate_w.shape[1]
    Ep = ((E + 127) // 128) * 128                 # lane-dense output
    tT = 128
    Tp = ((T + tT - 1) // tT) * tT
    x_p = jnp.pad(x, ((0, Tp - T), (0, 0))) if Tp != T else x
    w_p = jnp.pad(gate_w, ((0, 0), (0, Ep - E))) if Ep != E else gate_w
    logits_p = pl.pallas_call(
        _router_kernel,
        out_shape=jax.ShapeDtypeStruct((Tp, Ep), jnp.float32),
        grid_spec=pltpu.PrefetchScalarGridSpec(
            num_scalar_prefetch=0,
            grid=(Tp // tT,),
            in_specs=[
                pl.BlockSpec((tT, H), lambda t: (t, 0)),
                pl.BlockSpec((H, Ep), lambda t: (0, 0)),
            ],
            out_specs=pl.BlockSpec((tT, Ep), lambda t: (t, 0)),
        ),
        compiler_params=pltpu.CompilerParams(
            dimension_semantics=("parallel",)),
    )(x_p, w_p)
    return logits_p[:T, :E]


# --------------------------- grouped expert kernel ---------------------------

def _moe_kernel(te_ref, x_ref, rw_ref, wgu_ref, wd_ref, o_ref):
    # One tile of gathered assignment rows; all rows in the tile belong to a
    # single expert (selected by the scalar-prefetched tile->expert map through
    # the weight BlockSpecs).  Padding rows have routing weight 0 -> output 0.
    del te_ref
    I = wd_ref.shape[1]
    x = x_ref[...]                                                    # (tT, H) bf16
    gu = jnp.dot(x, wgu_ref[0], preferred_element_type=jnp.float32)   # (tT, 2I) f32
    g = gu[:, :I]
    u = gu[:, I:]
    h = (g * jax.nn.sigmoid(g)) * u                                   # SiLU(gate)*up
    h = h * rw_ref[...]                 # fold routing weight in before down proj
    y = jnp.dot(h.astype(x.dtype), wd_ref[0],
                preferred_element_type=jnp.float32)                   # (tT, H) f32
    o_ref[...] = y


def moe_experts_pallas(tile_expert, x_slab, rw_slab, wgu, wd, tT, vmem_limit):
    G, H = x_slab.shape
    E, _, I2 = wgu.shape
    I = I2 // 2
    n_tiles = G // tT
    return pl.pallas_call(
        _moe_kernel,
        out_shape=jax.ShapeDtypeStruct((G, H), jnp.float32),
        grid_spec=pltpu.PrefetchScalarGridSpec(
            num_scalar_prefetch=1,                       # tile -> expert map
            grid=(n_tiles,),
            in_specs=[
                pl.BlockSpec((tT, H), lambda t, te: (t, 0)),         # gathered x
                pl.BlockSpec((tT, 1), lambda t, te: (t, 0)),         # routing wts
                pl.BlockSpec((1, H, I2), lambda t, te: (te[t], 0, 0)),  # gate|up
                pl.BlockSpec((1, I, H), lambda t, te: (te[t], 0, 0)),   # down
            ],
            out_specs=pl.BlockSpec((tT, H), lambda t, te: (t, 0)),
        ),
        compiler_params=pltpu.CompilerParams(
            dimension_semantics=("parallel",),
            vmem_limit_bytes=vmem_limit),
    )(tile_expert, x_slab, rw_slab, wgu, wd)


# ------------------------------- sizing helpers ------------------------------

def _vmem_limit_bytes():
    try:
        cap = int(pltpu.get_tpu_info().vmem_capacity_bytes)
    except Exception:
        cap = 64 << 20                 # conservative (v7x-sized) fallback
    return int(max(32 << 20, min(cap - (8 << 20), 112 << 20)))


def _choose_token_tile(avg_rows_per_expert, H, I, vmem_budget):
    # Expert weights are re-streamed once per tile, so larger tiles raise
    # arithmetic intensity, but tiles larger than the average group size only
    # add padding compute.  Cap per generation (<=512 under a 64 MiB VMEM
    # budget, <=1024 otherwise) and by double-buffered VMEM residency.
    gen_cap = 1024 if vmem_budget >= (96 << 20) else 512
    target = pl.next_power_of_2(max(1, int(avg_rows_per_expert)))
    tT = int(min(gen_cap, max(128, target)))
    while tT > 8:
        est = (2 * tT * H * 2           # x tile, bf16, double-buffered
               + 2 * tT * 4             # routing-weight column, f32
               + 2 * tT * H * 4         # f32 output tile
               + 2 * H * (2 * I) * 2    # fused gate|up weights, bf16
               + 2 * I * H * 2)         # down weights, bf16
        if est <= int(vmem_budget * 0.85):
            break
        tT //= 2
    return max(tT, 8)


# -------------------------------- forward glue -------------------------------

def olmoe_sparse_moe_block(hidden_states, params, top_k, norm_topk_prob,
                           token_tile=None):
    B, S, H = hidden_states.shape
    E, _, I2 = params["wgu"].shape
    I = I2 // 2
    x = hidden_states.reshape(-1, H)                                  # (T, H)
    T = x.shape[0]

    # --- routing: gate -> softmax -> top-k (tiny; stays in JAX) ---
    router_logits = router_logits_pallas(x, params["gate_w"])         # (T, E) f32
    routing_weights = jax.nn.softmax(router_logits, axis=-1)
    topk_w, topk_idx = jax.lax.top_k(routing_weights, top_k)
    if norm_topk_prob:
        topk_w = topk_w / jnp.sum(topk_w, axis=-1, keepdims=True)
    topk_w = topk_w.astype(hidden_states.dtype)                       # match PyTorch cast

    # --- group (token, expert) assignments by expert into tile-aligned slabs ---
    A = T * top_k
    vmem_limit = _vmem_limit_bytes()
    tT = (token_tile if token_tile is not None
          else _choose_token_tile(A / E, H, I, vmem_limit))

    expert_flat = topk_idx.reshape(A).astype(jnp.int32)
    w_flat = topk_w.reshape(A).astype(jnp.float32)
    tok_flat = jnp.arange(A, dtype=jnp.int32) // top_k

    order = jnp.argsort(expert_flat)                                  # sort by expert
    e_sorted = expert_flat[order]
    group_sizes = jnp.bincount(expert_flat, length=E)                 # (E,)
    group_tiles = (group_sizes + tT - 1) // tT
    group_starts = jnp.concatenate(
        [jnp.zeros((1,), group_sizes.dtype), jnp.cumsum(group_sizes)[:-1]])
    padded_starts = tT * jnp.concatenate(
        [jnp.zeros((1,), group_tiles.dtype), jnp.cumsum(group_tiles)[:-1]])

    # destination slot of each sorted assignment inside the tile-aligned slab
    rank = jnp.arange(A, dtype=jnp.int32) - group_starts[e_sorted]
    dest = (padded_starts[e_sorted] + rank).astype(jnp.int32)         # (A,)

    n_tiles = pl.cdiv(A, tT) + E        # static upper bound on group tiles
    G = n_tiles * tT

    slot_tok = jnp.zeros((G,), jnp.int32).at[dest].set(tok_flat[order])
    slot_w = jnp.zeros((G,), jnp.float32).at[dest].set(w_flat[order])

    tile_ends = jnp.cumsum(group_tiles).astype(jnp.int32)
    tile_expert = jnp.searchsorted(
        tile_ends, jnp.arange(n_tiles, dtype=jnp.int32), side="right")
    tile_expert = jnp.minimum(tile_expert, E - 1).astype(jnp.int32)

    # --- gathered expert compute (Pallas) ---
    x_slab = x.astype(jnp.bfloat16)[slot_tok]                         # (G, H) bf16
    y_slab = moe_experts_pallas(tile_expert, x_slab, slot_w[:, None],
                                params["wgu"], params["wd"], tT, vmem_limit)

    # --- un-sort and reduce the top_k contributions per token ---
    dest_by_assign = jnp.zeros((A,), jnp.int32).at[order].set(dest)
    final = jnp.sum(y_slab[dest_by_assign].reshape(T, top_k, H), axis=1)
    out = final.astype(hidden_states.dtype).reshape(B, S, H)
    return out, router_logits


# --------------------------------- reference ---------------------------------

def ref_forward(hidden_states, params, top_k, norm_topk_prob, router_logits=None):
    B, S, H = hidden_states.shape
    E, _, I2 = params["wgu"].shape
    I = I2 // 2
    x = hidden_states.reshape(-1, H)
    logits_ref = jnp.dot(x, params["gate_w"], preferred_element_type=jnp.float32)
    logits = logits_ref if router_logits is None else router_logits
    rw = jax.nn.softmax(logits, axis=-1)
    tw, ti = jax.lax.top_k(rw, top_k)
    if norm_topk_prob:
        tw = tw / jnp.sum(tw, axis=-1, keepdims=True)
    tw = tw.astype(hidden_states.dtype)
    rw_dense = jnp.sum(jax.nn.one_hot(ti, E, dtype=jnp.float32)
                       * tw[..., None].astype(jnp.float32), axis=1)   # (T, E)

    xb = x.astype(jnp.bfloat16)
    acc = jnp.zeros((x.shape[0], H), jnp.float32)
    for e in range(E):
        wg = params["wgu"][e, :, :I]
        wu = params["wgu"][e, :, I:]
        g = jnp.dot(xb, wg, preferred_element_type=jnp.float32)
        u = jnp.dot(xb, wu, preferred_element_type=jnp.float32)
        h = (g * jax.nn.sigmoid(g)) * u * rw_dense[:, e:e + 1]
        y = jnp.dot(h.astype(jnp.bfloat16), params["wd"][e],
                    preferred_element_type=jnp.float32)
        acc = acc + y
    out = acc.astype(hidden_states.dtype)
    return out.reshape(B, S, H), logits_ref


# ----------------------------------- main ------------------------------------

if __name__ == "__main__":
    # Small OLMoE-like config (lane-friendly dims; T = 256 tokens).
    batch, seq = 4, 64
    hidden_size = 128
    intermediate_size = 256
    num_experts = 8
    top_k = 2
    norm_topk_prob = True

    key = jax.random.PRNGKey(0)
    k_x, k_gate, k_wg, k_wu, k_wd = jax.random.split(key, 5)

    hidden_states = jax.random.normal(k_x, (batch, seq, hidden_size), jnp.float32)

    wg = 0.02 * jax.random.normal(
        k_wg, (num_experts, hidden_size, intermediate_size), jnp.float32)
    wu = 0.02 * jax.random.normal(
        k_wu, (num_experts, hidden_size, intermediate_size), jnp.float32)
    wd = 0.02 * jax.random.normal(
        k_wd, (num_experts, intermediate_size, hidden_size), jnp.float32)

    params = {
        # nn.Linear(hidden, E) weight is (E, H); we store the transposed (H, E).
        "gate_w": 0.02 * jax.random.normal(
            k_gate, (hidden_size, num_experts), jnp.float32),
        # gate & up fused once at parameter-prep time: (E, H, 2I) bf16.
        "wgu": jnp.concatenate([wg, wu], axis=-1).astype(jnp.bfloat16),
        "wd": wd.astype(jnp.bfloat16),
    }

    fwd = jax.jit(functools.partial(
        olmoe_sparse_moe_block, top_k=top_k, norm_topk_prob=norm_topk_prob))

    out, router_logits = fwd(hidden_states, params)
    out = jax.block_until_ready(out)
    router_logits = jax.block_until_ready(router_logits)

    # Reference uses the kernel's router logits for routing (so both paths pick
    # identical experts); the logits themselves are checked separately.
    ref_out, ref_logits = ref_forward(hidden_states, params, top_k,
                                      norm_topk_prob, router_logits=router_logits)
    ref_out = jax.block_until_ready(ref_out)

    assert out.shape == (batch, seq, hidden_size)
    assert router_logits.shape == (batch * seq, num_experts)
    assert jnp.allclose(router_logits, ref_logits, rtol=2e-2, atol=5e-3), (
        float(jnp.max(jnp.abs(router_logits - ref_logits))))
    assert jnp.allclose(out, ref_out, rtol=2e-2, atol=1e-3), (
        float(jnp.max(jnp.abs(out - ref_out))))

    print("KERNEL_OK")
</pallas_src>

<mosaic_0001>
module attributes {stable_mosaic.version = 11 : i64} {
  func.func private @main(%arg0: i32) attributes {dimension_semantics = [#tpu.dimension_semantics<core_parallel>], iteration_bounds = array<i64: 2>, tpu.core_type = #tpu.core_type<sc_scalar_subcore>, window_params = []} {
    return
  }
}

module attributes {stable_mosaic.version = 11 : i64} {
  func.func private @main(%arg0: i32) attributes {dimension_semantics = [#tpu.dimension_semantics<core_parallel>], iteration_bounds = array<i64: 2>, tpu.core_type = #tpu.core_type<sc_scalar_subcore>, window_params = []} {
    return
  }
}

module attributes {stable_mosaic.version = 11 : i64} {
  func.func @_router_kernel(%arg0: i32, %arg1: memref<128x128xf32, #tpu.memory_space<vmem>>, %arg2: memref<128x128xf32, #tpu.memory_space<vmem>>, %arg3: memref<128x128xf32, #tpu.memory_space<vmem>>) attributes {dimension_semantics = [#tpu.dimension_semantics<parallel>], iteration_bounds = array<i64: 2>, scalar_prefetch = 0 : i64, scratch_operands = 0 : i64, tpu.core_type = #tpu.core_type<tc>, window_params = [{transform_indices = @transform_0, window_bounds = array<i64: 128, 128>}, {pipeline_mode = #tpu.pipeline_mode<synchronous>, transform_indices = @transform_1, window_bounds = array<i64: 128, 128>}, {transform_indices = @transform_2, window_bounds = array<i64: 128, 128>}]} {
    %c0 = arith.constant 0 : index
    %c0_0 = arith.constant 0 : index
    %0 = vector.load %arg1[%c0, %c0_0] : memref<128x128xf32, #tpu.memory_space<vmem>>, vector<128x128xf32>
    %c0_1 = arith.constant 0 : index
    %c0_2 = arith.constant 0 : index
    %1 = vector.load %arg2[%c0_1, %c0_2] : memref<128x128xf32, #tpu.memory_space<vmem>>, vector<128x128xf32>
    %cst = arith.constant dense<0.000000e+00> : vector<128x128xf32>
    %2 = tpu.matmul %0, %1, %cst {dimension_numbers = #tpu.dot_dimension_numbers<[1], [0], [0], [1], [0, 0, 1, 1], [], []>} : vector<128x128xf32>, vector<128x128xf32>, vector<128x128xf32> -> vector<128x128xf32>
    %c0_3 = arith.constant 0 : index
    %c0_4 = arith.constant 0 : index
    %3 = vector.load %arg3[%c0_3, %c0_4] : memref<128x128xf32, #tpu.memory_space<vmem>>, vector<128x128xf32>
    tpu.vector_store %arg3[%c0_3, %c0_4], %2 {strides = array<i32>} : memref<128x128xf32, #tpu.memory_space<vmem>>, vector<128x128xf32>,
    return
  }
  func.func @transform_0(%arg0: i32) -> (i32, i32) {
    %c0_i32 = arith.constant 0 : i32
    %c0_i32_0 = arith.constant 0 : i32
    return %arg0, %c0_i32 : i32, i32
  }
  func.func @transform_1(%arg0: i32) -> (i32, i32) {
    %c0_i32 = arith.constant 0 : i32
    %c0_i32_0 = arith.constant 0 : i32
    %c0_i32_1 = arith.constant 0 : i32
    return %c0_i32, %c0_i32_0 : i32, i32
  }
  func.func @transform_2(%arg0: i32) -> (i32, i32) {
    %c0_i32 = arith.constant 0 : i32
    %c0_i32_0 = arith.constant 0 : i32
    return %arg0, %c0_i32 : i32, i32
  }
}

module attributes {stable_mosaic.version = 11 : i64} {
  func.func @_moe_kernel(%arg0: i32, %arg1: memref<12xi32, #tpu.memory_space<smem>>, %arg2: memref<128x128xbf16, #tpu.memory_space<vmem>>, %arg3: memref<128x1xf32, #tpu.memory_space<vmem>>, %arg4: memref<1x128x512xbf16, #tpu.memory_space<vmem>>, %arg5: memref<1x256x128xbf16, #tpu.memory_space<vmem>>, %arg6: memref<128x128xf32, #tpu.memory_space<vmem>>) attributes {dimension_semantics = [#tpu.dimension_semantics<parallel>], iteration_bounds = array<i64: 12>, scalar_prefetch = 1 : i64, scratch_operands = 0 : i64, tpu.core_type = #tpu.core_type<tc>, window_params = [{transform_indices = @transform_0, window_bounds = array<i64: 128, 128>}, {transform_indices = @transform_1, window_bounds = array<i64: 128, 1>}, {transform_indices = @transform_2, window_bounds = array<i64: 1, 128, 512>}, {transform_indices = @transform_3, window_bounds = array<i64: 1, 256, 128>}, {transform_indices = @transform_4, window_bounds = array<i64: 128, 128>}]} {
    %c0 = arith.constant 0 : index
    %c0_0 = arith.constant 0 : index
    %0 = vector.load %arg2[%c0, %c0_0] : memref<128x128xbf16, #tpu.memory_space<vmem>>, vector<128x128xbf16>
    %c0_1 = arith.constant 0 : index
    %c0_2 = arith.constant 0 : index
    %c0_3 = arith.constant 0 : index
    %1 = vector.load %arg4[%c0_1, %c0_2, %c0_3] : memref<1x128x512xbf16, #tpu.memory_space<vmem>>, vector<1x128x512xbf16>
    %2 = vector.shape_cast %1 : vector<1x128x512xbf16> to vector<128x512xbf16>
    %cst = arith.constant dense<0.000000e+00> : vector<128x512xf32>
    %3 = tpu.matmul %0, %2, %cst {dimension_numbers = #tpu.dot_dimension_numbers<[1], [0], [0], [1], [0, 0, 1, 1], [], []>} : vector<128x128xbf16>, vector<128x512xbf16>, vector<128x512xf32> -> vector<128x512xf32>
    %4 = vector.extract_strided_slice %3 {offsets = [0, 0], sizes = [128, 256], strides = [1, 1]} : vector<128x512xf32> to vector<128x256xf32>
    %5 = vector.extract_strided_slice %3 {offsets = [0, 256], sizes = [128, 256], strides = [1, 1]} : vector<128x512xf32> to vector<128x256xf32>
    %6 = arith.negf %4 : vector<128x256xf32>
    %7 = math.exp %6 : vector<128x256xf32>
    %cst_4 = arith.constant 1.000000e+00 : f32
    %8 = vector.broadcast %cst_4 : f32 to vector<128x256xf32>
    %9 = arith.addf %8, %7 : vector<128x256xf32>
    %10 = arith.divf %8, %9 : vector<128x256xf32>
    %11 = arith.mulf %4, %10 : vector<128x256xf32>
    %12 = arith.mulf %11, %5 : vector<128x256xf32>
    %c0_5 = arith.constant 0 : index
    %c0_6 = arith.constant 0 : index
    %13 = vector.load %arg3[%c0_5, %c0_6] : memref<128x1xf32, #tpu.memory_space<vmem>>, vector<128x1xf32>
    %14 = vector.broadcast %13 : vector<128x1xf32> to vector<128x256xf32>
    %15 = arith.mulf %12, %14 : vector<128x256xf32>
    %16 = arith.truncf %15 : vector<128x256xf32> to vector<128x256xbf16>
    %c0_7 = arith.constant 0 : index
    %c0_8 = arith.constant 0 : index
    %c0_9 = arith.constant 0 : index
    %17 = vector.load %arg5[%c0_7, %c0_8, %c0_9] : memref<1x256x128xbf16, #tpu.memory_space<vmem>>, vector<1x256x128xbf16>
    %18 = vector.shape_cast %17 : vector<1x256x128xbf16> to vector<256x128xbf16>
    %cst_10 = arith.constant dense<0.000000e+00> : vector<128x128xf32>
    %19 = tpu.matmul %16, %18, %cst_10 {dimension_numbers = #tpu.dot_dimension_numbers<[1], [0], [0], [1], [0, 0, 1, 1], [], []>} : vector<128x256xbf16>, vector<256x128xbf16>, vector<128x128xf32> -> vector<128x128xf32>
    %c0_11 = arith.constant 0 : index
    %c0_12 = arith.constant 0 : index
    %20 = vector.load %arg6[%c0_11, %c0_12] : memref<128x128xf32, #tpu.memory_space<vmem>>, vector<128x128xf32>
    tpu.vector_store %arg6[%c0_11, %c0_12], %19 {strides = array<i32>} : memref<128x128xf32, #tpu.memory_space<vmem>>, vector<128x128xf32>,
    return
  }
  func.func @transform_0(%arg0: i32, %arg1: memref<12xi32, #tpu.memory_space<smem>>) -> (i32, i32) {
    %c0_i32 = arith.constant 0 : i32
    %c0_i32_0 = arith.constant 0 : i32
    return %arg0, %c0_i32 : i32, i32
  }
  func.func @transform_1(%arg0: i32, %arg1: memref<12xi32, #tpu.memory_space<smem>>) -> (i32, i32) {
    %c0_i32 = arith.constant 0 : i32
    %c0_i32_0 = arith.constant 0 : i32
    return %arg0, %c0_i32 : i32, i32
  }
  func.func @transform_2(%arg0: i32, %arg1: memref<12xi32, #tpu.memory_space<smem>>) -> (i32, i32, i32) {
    %0 = arith.index_cast %arg0 : i32 to index
    %1 = memref.load %arg1[%0] : memref<12xi32, #tpu.memory_space<smem>>
    %c0_i32 = arith.constant 0 : i32
    %c0_i32_0 = arith.constant 0 : i32
    %c0_i32_1 = arith.constant 0 : i32
    return %1, %c0_i32, %c0_i32_0 : i32, i32, i32
  }
  func.func @transform_3(%arg0: i32, %arg1: memref<12xi32, #tpu.memory_space<smem>>) -> (i32, i32, i32) {
    %0 = arith.index_cast %arg0 : i32 to index
    %1 = memref.load %arg1[%0] : memref<12xi32, #tpu.memory_space<smem>>
    %c0_i32 = arith.constant 0 : i32
    %c0_i32_0 = arith.constant 0 : i32
    %c0_i32_1 = arith.constant 0 : i32
    return %1, %c0_i32, %c0_i32_0 : i32, i32, i32
  }
  func.func @transform_4(%arg0: i32, %arg1: memref<12xi32, #tpu.memory_space<smem>>) -> (i32, i32) {
    %c0_i32 = arith.constant 0 : i32
    %c0_i32_0 = arith.constant 0 : i32
    return %arg0, %c0_i32 : i32, i32
  }
}

</mosaic_0001>

<llo_original>
// kernel: custom-call.1
$region0: #{custom-call.1}
  %s0 = inlined_call_operand.vmem [shape: u32[12], index: 0, kind: output, shape index: {}]

// kernel: olmoe_sparse_moe_block.2
$region0: #{olmoe_sparse_moe_block.2}
  #allocation0 [shape = 'u32[]', space=smem, size = 0x4, offset = 0x4, fixed_abs, tag = 'smem constant byte address 0x4 - core index']
  #allocation1 [shape = 'u32[144,128]{1,0:T(1,128)}', space=vmem, size = 0x12000, scoped, tag = 'internal scratch']
  %s0 = inlined_call_operand.vmem [shape: f32[256,128], index: 0, kind: input, shape index: {}]
  %s1 = inlined_call_operand.vmem [shape: f32[128,128], index: 1, kind: input, shape index: {}]
  %s2 = inlined_call_operand.vmem [shape: f32[256,128], index: 2, kind: output, shape index: {}]
  %s3 = sld [smem:[#allocation0]]
  $region41: #{olmoe_sparse_moe_block.2} parent=0
    _
  %s5 = ssub.s32 1, %s3
  %s6 = scalar_select 0, %s5, %s3
  loop: start=0, step=1, limit=4
  $region2: #{olmoe_sparse_moe_block.2} parent=0 // loop_pre_header
    _
  $region3: #{olmoe_sparse_moe_block.2} parent=0 // loop_header
    %s8 = sphi 0, %s12
    %p9 = scmp.ge.s32.totalorder %s8, 4
    %s18 = sphi 0, %s20
    %s21 = sphi 0, %s18
    %s22 = sphi 0, %s21
    %s38 = sphi 0, %s22
    %s42 = sphi 0, %s42
    %s44 = sphi 0, %s42
    %s45 = sphi 0, %s44
    %s59 = sphi 0, %s45
    %s65 = sphi 0, %s67
    %s68 = sphi 0, %s65
    %s69 = sphi 0, %s68
    %s85 = sphi 0, %s69
  $region4: #{olmoe_sparse_moe_block.2} parent=0 // loop_header_branch
    %11 = sbr.rel (%p9) target = $region8
  $region5: #{olmoe_sparse_moe_block.2} parent=0 // loop_body
    %s13 = ssub.s32 %s8, 1
    %s14 = ssub.s32 %s8, 2
    %s15 = sadd.s32 %s8, 1
    %s16 = ssub.s32 %s8, %s15
    %p17 = scmp.eq.s32.totalorder %s16, 0
    %s19 = sadd.s32 %s18, 1
    %s20 = scalar_select %p17, %s18, %s19
    %p23 = pneg %p17
    %p24 = scmp.eq.s32.totalorder %s8, 1
    %p25 = por %p23, %p24
    %p26 = scmp.ne.s32.totalorder %s18, %s21
    %p27 = scmp.eq.s32.totalorder %s8, 0
    %p28 = por %p26, %p27
    %p29 = scmp.ne.s32.totalorder %s18, %s21
    %p30 = scmp.eq.s32.totalorder %s13, 1
    %p31 = por %p29, %p30
    %p32 = scmp.ne.s32.totalorder %s21, %s22
    %p33 = scmp.eq.s32.totalorder %s13, 0
    %p34 = por %p32, %p33
    %p35 = scmp.ne.s32.totalorder %s21, %s22
    %p36 = scmp.eq.s32.totalorder %s14, 1
    %p37 = por %p35, %p36
    %p39 = scmp.ne.s32.totalorder %s22, %s38
    %p40 = scmp.eq.s32.totalorder %s14, 0
    %p41 = por %p39, %p40
    %s43 = sadd.s32 %s42, 1
    %p46 = scmp.eq.s32.totalorder %s8, 1
    %p47 = scmp.ne.s32.totalorder %s42, %s44
    %p48 = scmp.eq.s32.totalorder %s8, 0
    %p49 = por %p47, %p48
    %p50 = scmp.ne.s32.totalorder %s42, %s44
    %p51 = scmp.eq.s32.totalorder %s13, 1
    %p52 = por %p50, %p51
    %p53 = scmp.ne.s32.totalorder %s44, %s45
    %p54 = scmp.eq.s32.totalorder %s13, 0
    %p55 = por %p53, %p54
    %p56 = scmp.ne.s32.totalorder %s44, %s45
    %p57 = scmp.eq.s32.totalorder %s14, 1
    %p58 = por %p56, %p57
    %p60 = scmp.ne.s32.totalorder %s45, %s59
    %p61 = scmp.eq.s32.totalorder %s14, 0
    %p62 = por %p60, %p61
    %s63 = ssub.s32 %s8, %s15
    %p64 = scmp.eq.s32.totalorder %s63, 0
    %s66 = sadd.s32 %s65, 1
    %s67 = scalar_select %p64, %s65, %s66
    %p70 = pneg %p64
    %p71 = scmp.eq.s32.totalorder %s8, 1
    %p72 = por %p70, %p71
    %p73 = scmp.ne.s32.totalorder %s65, %s68
    %p74 = scmp.eq.s32.totalorder %s8, 0
    %p75 = por %p73, %p74
    %p76 = scmp.ne.s32.totalorder %s65, %s68
    %p77 = scmp.eq.s32.totalorder %s13, 1
    %p78 = por %p76, %p77
    %p79 = scmp.ne.s32.totalorder %s68, %s69
    %p80 = scmp.eq.s32.totalorder %s13, 0
    %p81 = por %p79, %p80
    %p82 = scmp.ne.s32.totalorder %s68, %s69
    %p83 = scmp.eq.s32.totalorder %s14, 1
    %p84 = por %p82, %p83
    %p86 = scmp.ne.s32.totalorder %s69, %s85
    %p87 = scmp.eq.s32.totalorder %s14, 0
    %p88 = por %p86, %p87
    %p89 = scmp.le.s32.totalorder 1, %s8
    %p90 = scmp.lt.s32.totalorder %s8, 3
    %p91 = pnand %p89, %p90
    %p92 = pneg %p91
    // Predicated region
    $region9: #{olmoe_sparse_moe_block.2} parent=5 // pred_check
      _
    $region10: #{olmoe_sparse_moe_block.2} parent=5 // pred_check_branch
      %94 = sbr.rel (%p91) target = $region12
    $region11: #{olmoe_sparse_moe_block.2} parent=5 // pred_region
      %s95 = ssub.s32 %s8, 1
      // Predicated region
      $region13: #{olmoe_sparse_moe_block.2} parent=11 // pred_check
        %p96 = pneg %p55
      $region14: #{olmoe_sparse_moe_block.2} parent=11 // pred_check_branch
        %98 = sbr.rel (%p96) target = $region16
      $region15: #{olmoe_sparse_moe_block.2} parent=11 // pred_region
        _
      $region16: #{olmoe_sparse_moe_block.2} parent=11 // pred_fallthru
        _
    $region12: #{olmoe_sparse_moe_block.2} parent=5 // pred_fallthru
      _
    %p99 = scmp.lt.s32.totalorder %s8, 2
    // Predicated region
    $region17: #{olmoe_sparse_moe_block.2} parent=5 // pred_check
      %p100 = pneg %p99
    $region18: #{olmoe_sparse_moe_block.2} parent=5 // pred_check_branch
      %102 = sbr.rel (%p100) target = $region20
    $region19: #{olmoe_sparse_moe_block.2} parent=5 // pred_region
      // Predicated region
      $region21: #{olmoe_sparse_moe_block.2} parent=19 // pred_check
        %p103 = pneg %p28
      $region22: #{olmoe_sparse_moe_block.2} parent=19 // pred_check_branch
        %105 = sbr.rel (%p103) target = $region24
      $region23: #{olmoe_sparse_moe_block.2} parent=19 // pred_region
        %s106 = smul.u32 16, %s8
        %p107 = scmp.lt.s32.totalorder %s106, 31
        %s108 = scalar_select %p107, %s106, 31
        %s109 = smul.addr %s108, 8
        %s110 = scalar_lea.vmem %s0, %s109
        %s111 = smul.u32 16, %s8
      $region24: #{olmoe_sparse_moe_block.2} parent=19 // pred_fallthru
        _
    $region20: #{olmoe_sparse_moe_block.2} parent=5 // pred_fallthru
      _
    %p112 = scmp.le.s32.totalorder 1, %s8
    %p113 = scmp.lt.s32.totalorder %s8, 3
    %p114 = pnand %p112, %p113
    %p115 = pneg %p114
    // Predicated region
    $region25: #{olmoe_sparse_moe_block.2} parent=5 // pred_check
      _
    $region26: #{olmoe_sparse_moe_block.2} parent=5 // pred_check_branch
      %117 = sbr.rel (%p114) target = $region28
    $region27: #{olmoe_sparse_moe_block.2} parent=5 // pred_region
      %s118 = ssub.s32 %s8, 1
      %s119 = smul.u32 16, %s13
      %p120 = scmp.lt.s32.totalorder %s119, 31
      %s121 = scalar_select %p120, %s119, 31
      %s122 = smul.addr %s121, 8
      %s123 = scalar_lea.vmem %s0, %s122
      %p124 = pneg %p34
      %p125 = pneg %p31
      %p126 = pneg %p55
      %p127 = pneg %p52
      %p128 = pneg %p81
      %p129 = pneg %p78
      %s130 = smul.u32 16, %s13
      %p131 = scmp.lt.s32.totalorder %s130, 31
      %s132 = scalar_select %p131, %s130, 31
      %s133 = smul.addr %s132, 8
      %s134 = scalar_lea.vmem %s2, %s133
      %s135 = smul.u32 16, %s13
      %p136 = scmp.lt.s32.totalorder %s135, 31
      %s137 = scalar_select %p136, %s135, 31
      %s138 = smul.addr %s137, 8
      %s139 = scalar_lea.vmem %s0, %s138
      %s140 = smul.u32 16, %s13
      %s141 = smul.u32 16, %s13
      %p142 = scmp.lt.s32.totalorder %s141, 31
      %s143 = scalar_select %p142, %s141, 31
      %s144 = smul.addr %s143, 8
      %s145 = scalar_lea.vmem %s2, %s144
      %s146 = smul.u32 16, %s13
      %v147 = vld [vmem:[%s139] sm:$0xff]
      %v148 = vld [vmem:[%s139 + $0x8] sm:$0xff]
      %v149 = vld [vmem:[%s139 + $0x10] sm:$0xff]
      %v150 = vld [vmem:[%s139 + $0x18] sm:$0xff]
      %v151 = vld [vmem:[%s139 + $0x20] sm:$0xff]
      %v152 = vld [vmem:[%s139 + $0x28] sm:$0xff]
      %v153 = vld [vmem:[%s139 + $0x30] sm:$0xff]
      %v154 = vld [vmem:[%s139 + $0x38] sm:$0xff]
      %v155 = vld [vmem:[%s139 + $0x40] sm:$0xff]
      %v156 = vld [vmem:[%s139 + $0x48] sm:$0xff]
      %v157 = vld [vmem:[%s139 + $0x50] sm:$0xff]
      %v158 = vld [vmem:[%s139 + $0x58] sm:$0xff]
      %v159 = vld [vmem:[%s139 + $0x60] sm:$0xff]
      %v160 = vld [vmem:[%s139 + $0x68] sm:$0xff]
      %v161 = vld [vmem:[%s139 + $0x70] sm:$0xff]
      %v162 = vld [vmem:[%s139 + $0x78] sm:$0xff]
      %v163 = vld [vmem:[%s1] sm:$0xff]
      %v164 = vld [vmem:[%s1 + $0x8] sm:$0xff]
      %v165 = vld [vmem:[%s1 + $0x10] sm:$0xff]
      %v166 = vld [vmem:[%s1 + $0x18] sm:$0xff]
      %v167 = vld [vmem:[%s1 + $0x20] sm:$0xff]
      %v168 = vld [vmem:[%s1 + $0x28] sm:$0xff]
      %v169 = vld [vmem:[%s1 + $0x30] sm:$0xff]
      %v170 = vld [vmem:[%s1 + $0x38] sm:$0xff]
      %v171 = vld [vmem:[%s1 + $0x40] sm:$0xff]
      %v172 = vld [vmem:[%s1 + $0x48] sm:$0xff]
      %v173 = vld [vmem:[%s1 + $0x50] sm:$0xff]
      %v174 = vld [vmem:[%s1 + $0x58] sm:$0xff]
      %v175 = vld [vmem:[%s1 + $0x60] sm:$0xff]
      %v176 = vld [vmem:[%s1 + $0x68] sm:$0xff]
      %v177 = vld [vmem:[%s1 + $0x70] sm:$0xff]
      %v178 = vld [vmem:[%s1 + $0x78] sm:$0xff]
      %179 = vmatprep.subr.mxu0 0.0
      %180 = vmatpush1.msra.mxu0 %v178
      %181 = vmatprep.subr.mxu0 0.0
      %182 = vmatpush1.msra.mxu0 %v177
      %183 = vmatprep.subr.mxu0 0.0
      %184 = vmatpush1.msra.mxu0 %v176
      %185 = vmatprep.subr.mxu0 0.0
      %186 = vmatpush1.msra.mxu0 %v175
      %187 = vmatprep.subr.mxu0 0.0
      %188 = vmatpush1.msra.mxu0 %v174
      %189 = vmatprep.subr.mxu0 0.0
      %190 = vmatpush1.msra.mxu0 %v173
      %191 = vmatprep.subr.mxu0 0.0
      %192 = vmatpush1.msra.mxu0 %v172
      %193 = vmatprep.subr.mxu0 0.0
      %194 = vmatpush1.msra.mxu0 %v171
      %195 = vmatprep.subr.mxu0 0.0
      %196 = vmatpush1.msra.mxu0 %v170
      %197 = vmatprep.subr.mxu0 0.0
      %198 = vmatpush1.msra.mxu0 %v169
      %199 = vmatprep.subr.mxu0 0.0
      %200 = vmatpush1.msra.mxu0 %v168
      %201 = vmatprep.subr.mxu0 0.0
      %202 = vmatpush1.msra.mxu0 %v167
      %203 = vmatprep.subr.mxu0 0.0
      %204 = vmatpush1.msra.mxu0 %v166
      %205 = vmatprep.subr.mxu0 0.0
      %206 = vmatpush1.msra.mxu0 %v165
      %207 = vmatprep.subr.mxu0 0.0
      %208 = vmatpush1.msra.mxu0 %v164
      %209 = vmatprep.subr.mxu0 0.0
      %210 = vmatpush1.msra.mxu0 %v163
      %211 = vmatprep.subr.mxu0 0.0
      %212 = vmatpush2.msra.mxu0 0.0
      %213 = vmatprep.subr.mxu0 0.0
      %214 = vmatpush2.msra.mxu0 0.0
      %215 = vmatprep.subr.mxu0 0.0
      %216 = vmatpush2.msra.mxu0 0.0
      %217 = vmatprep.subr.mxu0 0.0
      %218 = vmatpush2.msra.mxu0 0.0
      %219 = vmatprep.subr.mxu0 0.0
      %220 = vmatpush2.msra.mxu0 0.0
      %221 = vmatprep.subr.mxu0 0.0
      %222 = vmatpush2.msra.mxu0 0.0
      %223 = vmatprep.subr.mxu0 0.0
      %224 = vmatpush2.msra.mxu0 0.0
      %225 = vmatprep.subr.mxu0 0.0
      %226 = vmatpush2.msra.mxu0 0.0
      %227 = vmatprep.subr.mxu0 0.0
      %228 = vmatpush2.msra.mxu0 0.0
      %229 = vmatprep.subr.mxu0 0.0
      %230 = vmatpush2.msra.mxu0 0.0
      %231 = vmatprep.subr.mxu0 0.0
      %232 = vmatpush2.msra.mxu0 0.0
      %233 = vmatprep.subr.mxu0 0.0
      %234 = vmatpush2.msra.mxu0 0.0
      %235 = vmatprep.subr.mxu0 0.0
      %236 = vmatpush2.msra.mxu0 0.0
      %237 = vmatprep.subr.mxu0 0.0
      %238 = vmatpush2.msra.mxu0 0.0
      %239 = vmatprep.subr.mxu0 0.0
      %240 = vmatpush2.msra.mxu0 0.0
      %241 = vmatprep.subr.mxu0 0.0
      %242 = vmatpush2.msra.mxu0 0.0
      %243 = vmatprep.mubr.f32.mxu0 0.0
      %244 = vmatmul.mubr.f32.gmra.mxu0 %v147
      %v245 = vpop.f32.mrf.mxu0
      %v246 = vadd.f32 0.0, %v245
      %v247 = vpop.f32.mrf.mxu0
      %248 = vmatprep.mubr.f32.mxu0 0.0
      %249 = vmatmul.mubr.f32.gmra.mxu0 %v148
      %v250 = vpop.f32.mrf.mxu0
      %v251 = vadd.f32 0.0, %v250
      %v252 = vpop.f32.mrf.mxu0
      %253 = vmatprep.mubr.f32.mxu0 0.0
      %254 = vmatmul.mubr.f32.gmra.mxu0 %v149
      %v255 = vpop.f32.mrf.mxu0
      %v256 = vadd.f32 0.0, %v255
      %v257 = vpop.f32.mrf.mxu0
      %258 = vmatprep.mubr.f32.mxu0 0.0
      %259 = vmatmul.mubr.f32.gmra.mxu0 %v150
      %v260 = vpop.f32.mrf.mxu0
      %v261 = vadd.f32 0.0, %v260
      %v262 = vpop.f32.mrf.mxu0
      %263 = vmatprep.mubr.f32.mxu0 0.0
      %264 = vmatmul.mubr.f32.gmra.mxu0 %v151
      %v265 = vpop.f32.mrf.mxu0
      %v266 = vadd.f32 0.0, %v265
      %v267 = vpop.f32.mrf.mxu0
      %268 = vmatprep.mubr.f32.mxu0 0.0
      %269 = vmatmul.mubr.f32.gmra.mxu0 %v152
      %v270 = vpop.f32.mrf.mxu0
      %v271 = vadd.f32 0.0, %v270
      %v272 = vpop.f32.mrf.mxu0
      %273 = vmatprep.mubr.f32.mxu0 0.0
      %274 = vmatmul.mubr.f32.gmra.mxu0 %v153
      %v275 = vpop.f32.mrf.mxu0
      %v276 = vadd.f32 0.0, %v275
      %v277 = vpop.f32.mrf.mxu0
      %278 = vmatprep.mubr.f32.mxu0 0.0
      %279 = vmatmul.mubr.f32.gmra.mxu0 %v154
      %v280 = vpop.f32.mrf.mxu0
      %v281 = vadd.f32 0.0, %v280
      %v282 = vpop.f32.mrf.mxu0
      %283 = vmatprep.mubr.f32.mxu0 0.0
      %284 = vmatmul.mubr.f32.gmra.mxu0 %v155
      %v285 = vpop.f32.mrf.mxu0
      %v286 = vadd.f32 0.0, %v285
      %v287 = vpop.f32.mrf.mxu0
      %288 = vmatprep.mubr.f32.mxu0 0.0
      %289 = vmatmul.mubr.f32.gmra.mxu0 %v156
      %v290 = vpop.f32.mrf.mxu0
      %v291 = vadd.f32 0.0, %v290
      %v292 = vpop.f32.mrf.mxu0
      %293 = vmatprep.mubr.f32.mxu0 0.0
      %294 = vmatmul.mubr.f32.gmra.mxu0 %v157
      %v295 = vpop.f32.mrf.mxu0
      %v296 = vadd.f32 0.0, %v295
      %v297 = vpop.f32.mrf.mxu0
      %298 = vmatprep.mubr.f32.mxu0 0.0
      %299 = vmatmul.mubr.f32.gmra.mxu0 %v158
      %v300 = vpop.f32.mrf.mxu0
      %v301 = vadd.f32 0.0, %v300
      %v302 = vpop.f32.mrf.mxu0
      %303 = vmatprep.mubr.f32.mxu0 0.0
      %304 = vmatmul.mubr.f32.gmra.mxu0 %v159
      %v305 = vpop.f32.mrf.mxu0
      %v306 = vadd.f32 0.0, %v305
      %v307 = vpop.f32.mrf.mxu0
      %308 = vmatprep.mubr.f32.mxu0 0.0
      %309 = vmatmul.mubr.f32.gmra.mxu0 %v160
      %v310 = vpop.f32.mrf.mxu0
      %v311 = vadd.f32 0.0, %v310
      %v312 = vpop.f32.mrf.mxu0
      %313 = vmatprep.mubr.f32.mxu0 0.0
      %314 = vmatmul.mubr.f32.gmra.mxu0 %v161
      %v315 = vpop.f32.mrf.mxu0
      %v316 = vadd.f32 0.0, %v315
      %v317 = vpop.f32.mrf.mxu0
      %318 = vmatprep.mubr.f32.mxu0 0.0
      %319 = vmatmul.mubr.f32.gmra.mxu0 %v162
      %v320 = vpop.f32.mrf.mxu0
      %v321 = vadd.f32 0.0, %v320
      %v322 = vpop.f32.mrf.mxu0
      %323 = vdwg.mxu0
      %324 = vst [vmem:[%s145] sm:$0xff] %v246
      %325 = vst [vmem:[%s145 + $0x8] sm:$0xff] %v251
      %326 = vst [vmem:[%s145 + $0x10] sm:$0xff] %v256
      %327 = vst [vmem:[%s145 + $0x18] sm:$0xff] %v261
      %328 = vst [vmem:[%s145 + $0x20] sm:$0xff] %v266
      %329 = vst [vmem:[%s145 + $0x28] sm:$0xff] %v271
      %330 = vst [vmem:[%s145 + $0x30] sm:$0xff] %v276
      %331 = vst [vmem:[%s145 + $0x38] sm:$0xff] %v281
      %332 = vst [vmem:[%s145 + $0x40] sm:$0xff] %v286
      %333 = vst [vmem:[%s145 + $0x48] sm:$0xff] %v291
      %334 = vst [vmem:[%s145 + $0x50] sm:$0xff] %v296
      %335 = vst [vmem:[%s145 + $0x58] sm:$0xff] %v301
      %336 = vst [vmem:[%s145 + $0x60] sm:$0xff] %v306
      %337 = vst [vmem:[%s145 + $0x68] sm:$0xff] %v311
      %338 = vst [vmem:[%s145 + $0x70] sm:$0xff] %v316
      %339 = vst [vmem:[%s145 + $0x78] sm:$0xff] %v321
      %s340 = smul.u32 16, %s13
      %p341 = scmp.lt.s32.totalorder %s340, 31
      %s342 = scalar_select %p341, %s340, 31
      %s343 = smul.addr %s342, 8
      %s344 = scalar_lea.vmem %s2, %s343
      // Predicated region
      $region29: #{olmoe_sparse_moe_block.2} parent=27 // pred_check
        %p345 = pneg %p78
      $region30: #{olmoe_sparse_moe_block.2} parent=27 // pred_check_branch
        %347 = sbr.rel (%p345) target = $region32
      $region31: #{olmoe_sparse_moe_block.2} parent=27 // pred_region
        %s348 = smul.u32 16, %s13
      $region32: #{olmoe_sparse_moe_block.2} parent=27 // pred_fallthru
        _
    $region28: #{olmoe_sparse_moe_block.2} parent=5 // pred_fallthru
      _
    %p349 = scmp.le.s32.totalorder 2, %s8
    // Predicated region
    $region33: #{olmoe_sparse_moe_block.2} parent=5 // pred_check
      %p350 = pneg %p349
    $region34: #{olmoe_sparse_moe_block.2} parent=5 // pred_check_branch
      %352 = sbr.rel (%p350) target = $region36
    $region35: #{olmoe_sparse_moe_block.2} parent=5 // pred_region
      %s353 = ssub.s32 %s8, 2
      // Predicated region
      $region37: #{olmoe_sparse_moe_block.2} parent=35 // pred_check
        %p354 = pneg %p84
      $region38: #{olmoe_sparse_moe_block.2} parent=35 // pred_check_branch
        %356 = sbr.rel (%p354) target = $region40
      $region39: #{olmoe_sparse_moe_block.2} parent=35 // pred_region
        %s357 = smul.u32 16, %s14
        %p358 = scmp.lt.s32.totalorder %s357, 31
        %s359 = scalar_select %p358, %s357, 31
        %s360 = smul.addr %s359, 8
        %s361 = scalar_lea.vmem %s2, %s360
      $region40: #{olmoe_sparse_moe_block.2} parent=35 // pred_fallthru
        _
    $region36: #{olmoe_sparse_moe_block.2} parent=5 // pred_fallthru
      _
  $region6: #{olmoe_sparse_moe_block.2} parent=0 // loop_footer
    %s12 = sadd.s32 1, %s8
  $region7: #{olmoe_sparse_moe_block.2} parent=0 // loop_footer_branch
    %7 = sbr.rel target = $region3
  $region8: #{olmoe_sparse_moe_block.2} parent=0 // loop_exit
    _

// kernel: olmoe_sparse_moe_block.3
$region0: #{olmoe_sparse_moe_block.3}
  #allocation0 [shape = 'u32[]', space=smem, size = 0x4, offset = 0x4, fixed_abs, tag = 'smem constant byte address 0x4 - core index']
  #allocation1 [shape = 'u32[144,128]{1,0:T(1,128)}', space=vmem, size = 0x12000, scoped, tag = 'internal scratch']
  #allocation2 [shape = 's32[1]{0}', space=sflag, size = 0x4, scoped, tag = 'scoped memory for olmoe_sparse_moe_block.3']
  #allocation3 [shape = 'u8[512]{0}', space=smem, size = 0x200, scoped, tag = 'prefetched SMEM operand 0']
  %s0 = inlined_call_operand.vmem [shape: s32[12], index: 0, kind: input, shape index: {}]
  %s1 = inlined_call_operand.vmem [shape: bf16[1536,128], index: 1, kind: input, shape index: {}]
  %s2 = inlined_call_operand.vmem [shape: f32[1536,1], index: 2, kind: input, shape index: {}]
  %s3 = inlined_call_operand.vmem [shape: bf16[8,128,512], index: 3, kind: input, shape index: {}]
  %s4 = inlined_call_operand.vmem [shape: bf16[8,256,128], index: 4, kind: input, shape index: {}]
  %s5 = inlined_call_operand.vmem [shape: f32[1536,128], index: 5, kind: output, shape index: {}]
  %s6 = sld [smem:[#allocation0]]
  $region49: #{olmoe_sparse_moe_block.3} parent=0
    _
  %s8 = ssub.s32 1, %s6
  %s9 = scalar_select 0, %s8, %s6
  %s10 = sshll.u32 %s0, 4
  %s11 = int_to_ptr.vmem [resolvable:$true] %s10
  %13 = dma.vmem_to_smem %s11, 16, [#allocation3], [#allocation2]
  %14 = dma.done [#allocation2], 16
  %15 = sfence
  loop: start=0, step=1, limit=14
  $region2: #{olmoe_sparse_moe_block.3} parent=0 // loop_pre_header
    _
  $region3: #{olmoe_sparse_moe_block.3} parent=0 // loop_header
    %s17 = sphi 0, %s21
    %p18 = scmp.ge.s32.totalorder %s17, 14
    %s27 = sphi 0, %s29
    %s30 = sphi 0, %s27
    %s31 = sphi 0, %s30
    %s47 = sphi 0, %s31
    %s53 = sphi 0, %s55
    %s56 = sphi 0, %s53
    %s57 = sphi 0, %s56
    %s73 = sphi 0, %s57
    %s81 = sphi 0, %s83
    %s84 = sphi 0, %s81
    %s85 = sphi 0, %s84
    %s101 = sphi 0, %s85
    %s109 = sphi 0, %s111
    %s112 = sphi 0, %s109
    %s113 = sphi 0, %s112
    %s129 = sphi 0, %s113
    %s135 = sphi 0, %s137
    %s138 = sphi 0, %s135
    %s139 = sphi 0, %s138
    %s155 = sphi 0, %s139
  $region4: #{olmoe_sparse_moe_block.3} parent=0 // loop_header_branch
    %20 = sbr.rel (%p18) target = $region8
  $region5: #{olmoe_sparse_moe_block.3} parent=0 // loop_body
    %s22 = ssub.s32 %s17, 1
    %s23 = ssub.s32 %s17, 2
    %s24 = sadd.s32 %s17, 1
    %s25 = ssub.s32 %s17, %s24
    %p26 = scmp.eq.s32.totalorder %s25, 0
    %s28 = sadd.s32 %s27, 1
    %s29 = scalar_select %p26, %s27, %s28
    %p32 = pneg %p26
    %p33 = scmp.eq.s32.totalorder %s17, 11
    %p34 = por %p32, %p33
    %p35 = scmp.ne.s32.totalorder %s27, %s30
    %p36 = scmp.eq.s32.totalorder %s17, 0
    %p37 = por %p35, %p36
    %p38 = scmp.ne.s32.totalorder %s27, %s30
    %p39 = scmp.eq.s32.totalorder %s22, 11
    %p40 = por %p38, %p39
    %p41 = scmp.ne.s32.totalorder %s30, %s31
    %p42 = scmp.eq.s32.totalorder %s22, 0
    %p43 = por %p41, %p42
    %p44 = scmp.ne.s32.totalorder %s30, %s31
    %p45 = scmp.eq.s32.totalorder %s23, 11
    %p46 = por %p44, %p45
    %p48 = scmp.ne.s32.totalorder %s31, %s47
    %p49 = scmp.eq.s32.totalorder %s23, 0
    %p50 = por %p48, %p49
    %s51 = ssub.s32 %s17, %s24
    %p52 = scmp.eq.s32.totalorder %s51, 0
    %s54 = sadd.s32 %s53, 1
    %s55 = scalar_select %p52, %s53, %s54
    %p58 = pneg %p52
    %p59 = scmp.eq.s32.totalorder %s17, 11
    %p60 = por %p58, %p59
    %p61 = scmp.ne.s32.totalorder %s53, %s56
    %p62 = scmp.eq.s32.totalorder %s17, 0
    %p63 = por %p61, %p62
    %p64 = scmp.ne.s32.totalorder %s53, %s56
    %p65 = scmp.eq.s32.totalorder %s22, 11
    %p66 = por %p64, %p65
    %p67 = scmp.ne.s32.totalorder %s56, %s57
    %p68 = scmp.eq.s32.totalorder %s22, 0
    %p69 = por %p67, %p68
    %p70 = scmp.ne.s32.totalorder %s56, %s57
    %p71 = scmp.eq.s32.totalorder %s23, 11
    %p72 = por %p70, %p71
    %p74 = scmp.ne.s32.totalorder %s57, %s73
    %p75 = scmp.eq.s32.totalorder %s23, 0
    %p76 = por %p74, %p75
    %s77 = sld [smem:[#allocation3 + %s17]]
    %s78 = sld [smem:[#allocation3 + %s24]]
    %s79 = ssub.s32 %s77, %s78
    %p80 = scmp.eq.s32.totalorder %s79, 0
    %s82 = sadd.s32 %s81, 1
    %s83 = scalar_select %p80, %s81, %s82
    %p86 = pneg %p80
    %p87 = scmp.eq.s32.totalorder %s17, 11
    %p88 = por %p86, %p87
    %p89 = scmp.ne.s32.totalorder %s81, %s84
    %p90 = scmp.eq.s32.totalorder %s17, 0
    %p91 = por %p89, %p90
    %p92 = scmp.ne.s32.totalorder %s81, %s84
    %p93 = scmp.eq.s32.totalorder %s22, 11
    %p94 = por %p92, %p93
    %p95 = scmp.ne.s32.totalorder %s84, %s85
    %p96 = scmp.eq.s32.totalorder %s22, 0
    %p97 = por %p95, %p96
    %p98 = scmp.ne.s32.totalorder %s84, %s85
    %p99 = scmp.eq.s32.totalorder %s23, 11
    %p100 = por %p98, %p99
    %p102 = scmp.ne.s32.totalorder %s85, %s101
    %p103 = scmp.eq.s32.totalorder %s23, 0
    %p104 = por %p102, %p103
    %s105 = sld [smem:[#allocation3 + %s17]]
    %s106 = sld [smem:[#allocation3 + %s24]]
    %s107 = ssub.s32 %s105, %s106
    %p108 = scmp.eq.s32.totalorder %s107, 0
    %s110 = sadd.s32 %s109, 1
    %s111 = scalar_select %p108, %s109, %s110
    %p114 = pneg %p108
    %p115 = scmp.eq.s32.totalorder %s17, 11
    %p116 = por %p114, %p115
    %p117 = scmp.ne.s32.totalorder %s109, %s112
    %p118 = scmp.eq.s32.totalorder %s17, 0
    %p119 = por %p117, %p118
    %p120 = scmp.ne.s32.totalorder %s109, %s112
    %p121 = scmp.eq.s32.totalorder %s22, 11
    %p122 = por %p120, %p121
    %p123 = scmp.ne.s32.totalorder %s112, %s113
    %p124 = scmp.eq.s32.totalorder %s22, 0
    %p125 = por %p123, %p124
    %p126 = scmp.ne.s32.totalorder %s112, %s113
    %p127 = scmp.eq.s32.totalorder %s23, 11
    %p128 = por %p126, %p127
    %p130 = scmp.ne.s32.totalorder %s113, %s129
    %p131 = scmp.eq.s32.totalorder %s23, 0
    %p132 = por %p130, %p131
    %s133 = ssub.s32 %s17, %s24
    %p134 = scmp.eq.s32.totalorder %s133, 0
    %s136 = sadd.s32 %s135, 1
    %s137 = scalar_select %p134, %s135, %s136
    %p140 = pneg %p134
    %p141 = scmp.eq.s32.totalorder %s17, 11
    %p142 = por %p140, %p141
    %p143 = scmp.ne.s32.totalorder %s135, %s138
    %p144 = scmp.eq.s32.totalorder %s17, 0
    %p145 = por %p143, %p144
    %p146 = scmp.ne.s32.totalorder %s135, %s138
    %p147 = scmp.eq.s32.totalorder %s22, 11
    %p148 = por %p146, %p147
    %p149 = scmp.ne.s32.totalorder %s138, %s139
    %p150 = scmp.eq.s32.totalorder %s22, 0
    %p151 = por %p149, %p150
    %p152 = scmp.ne.s32.totalorder %s138, %s139
    %p153 = scmp.eq.s32.totalorder %s23, 11
    %p154 = por %p152, %p153
    %p156 = scmp.ne.s32.totalorder %s139, %s155
    %p157 = scmp.eq.s32.totalorder %s23, 0
    %p158 = por %p156, %p157
    %p159 = scmp.le.s32.totalorder 1, %s17
    %p160 = scmp.lt.s32.totalorder %s17, 13
    %p161 = pnand %p159, %p160
    %p162 = pneg %p161
    // Predicated region
    $region9: #{olmoe_sparse_moe_block.3} parent=5 // pred_check
      _
    $region10: #{olmoe_sparse_moe_block.3} parent=5 // pred_check_branch
      %164 = sbr.rel (%p161) target = $region12
    $region11: #{olmoe_sparse_moe_block.3} parent=5 // pred_region
      %s165 = ssub.s32 %s17, 1
    $region12: #{olmoe_sparse_moe_block.3} parent=5 // pred_fallthru
      _
    %p166 = scmp.lt.s32.totalorder %s17, 12
    // Predicated region
    $region13: #{olmoe_sparse_moe_block.3} parent=5 // pred_check
      %p167 = pneg %p166
    $region14: #{olmoe_sparse_moe_block.3} parent=5 // pred_check_branch
      %169 = sbr.rel (%p167) target = $region16
    $region15: #{olmoe_sparse_moe_block.3} parent=5 // pred_region
      // Predicated region
      $region17: #{olmoe_sparse_moe_block.3} parent=15 // pred_check
        %p170 = pneg %p37
      $region18: #{olmoe_sparse_moe_block.3} parent=15 // pred_check_branch
        %172 = sbr.rel (%p170) target = $region20
      $region19: #{olmoe_sparse_moe_block.3} parent=15 // pred_region
        %s173 = smul.u32 16, %s17
        %p174 = scmp.lt.s32.totalorder %s173, 191
        %s175 = scalar_select %p174, %s173, 191
        %s176 = smul.addr %s175, 4
        %s177 = scalar_lea.vmem %s1, %s176
        %s178 = smul.u32 16, %s17
      $region20: #{olmoe_sparse_moe_block.3} parent=15 // pred_fallthru
        _
      // Predicated region
      $region21: #{olmoe_sparse_moe_block.3} parent=15 // pred_check
        %p179 = pneg %p63
      $region22: #{olmoe_sparse_moe_block.3} parent=15 // pred_check_branch
        %181 = sbr.rel (%p179) target = $region24
      $region23: #{olmoe_sparse_moe_block.3} parent=15 // pred_region
        %s182 = smul.u32 16, %s17
        %p183 = scmp.lt.s32.totalorder %s182, 191
        %s184 = scalar_select %p183, %s182, 191
        %s185 = smul.addr %s184, 8
        %s186 = scalar_lea.vmem %s2, %s185
        %s187 = smul.u32 16, %s17
      $region24: #{olmoe_sparse_moe_block.3} parent=15 // pred_fallthru
        _
      // Predicated region
      $region25: #{olmoe_sparse_moe_block.3} parent=15 // pred_check
        %p188 = pneg %p91
      $region26: #{olmoe_sparse_moe_block.3} parent=15 // pred_check_branch
        %190 = sbr.rel (%p188) target = $region28
      $region27: #{olmoe_sparse_moe_block.3} parent=15 // pred_region
        %s191 = sld [smem:[#allocation3 + %s17]]
        %p192 = scmp.lt.s32.totalorder %s191, 7
        %s193 = scalar_select %p192, %s191, 7
        %s194 = smul.addr %s193, 64
        %s195 = smul.addr %s194, 4
        %s196 = scalar_lea.vmem %s3, %s195
        %s197 = sld [smem:[#allocation3 + %s17]]
      $region28: #{olmoe_sparse_moe_block.3} parent=15 // pred_fallthru
        _
      // Predicated region
      $region29: #{olmoe_sparse_moe_block.3} parent=15 // pred_check
        %p198 = pneg %p119
      $region30: #{olmoe_sparse_moe_block.3} parent=15 // pred_check_branch
        %200 = sbr.rel (%p198) target = $region32
      $region31: #{olmoe_sparse_moe_block.3} parent=15 // pred_region
        %s201 = sld [smem:[#allocation3 + %s17]]
        %p202 = scmp.lt.s32.totalorder %s201, 7
        %s203 = scalar_select %p202, %s201, 7
        %s204 = smul.addr %s203, 32
        %s205 = smul.addr %s204, 4
        %s206 = scalar_lea.vmem %s4, %s205
        %s207 = sld [smem:[#allocation3 + %s17]]
      $region32: #{olmoe_sparse_moe_block.3} parent=15 // pred_fallthru
        _
    $region16: #{olmoe_sparse_moe_block.3} parent=5 // pred_fallthru
      _
    %p208 = scmp.le.s32.totalorder 1, %s17
    %p209 = scmp.lt.s32.totalorder %s17, 13
    %p210 = pnand %p208, %p209
    %p211 = pneg %p210
    // Predicated region
    $region33: #{olmoe_sparse_moe_block.3} parent=5 // pred_check
      _
    $region34: #{olmoe_sparse_moe_block.3} parent=5 // pred_check_branch
      %213 = sbr.rel (%p210) target = $region36
    $region35: #{olmoe_sparse_moe_block.3} parent=5 // pred_region
      %s214 = ssub.s32 %s17, 1
      %s215 = smul.u32 16, %s22
      %p216 = scmp.lt.s32.totalorder %s215, 191
      %s217 = scalar_select %p216, %s215, 191
      %s218 = smul.addr %s217, 4
      %s219 = scalar_lea.vmem %s1, %s218
      %p220 = pneg %p43
      %p221 = pneg %p40
      %s222 = smul.u32 16, %s22
      %p223 = scmp.lt.s32.totalorder %s222, 191
      %s224 = scalar_select %p223, %s222, 191
      %s225 = smul.addr %s224, 8
      %s226 = scalar_lea.vmem %s2, %s225
      %p227 = pneg %p69
      %p228 = pneg %p66
      %s229 = sld [smem:[#allocation3 + %s22]]
      %p230 = scmp.lt.s32.totalorder %s229, 7
      %s231 = scalar_select %p230, %s229, 7
      %s232 = smul.addr %s231, 64
      %s233 = smul.addr %s232, 4
      %s234 = scalar_lea.vmem %s3, %s233
      %p235 = pneg %p97
      %p236 = pneg %p94
      %s237 = sld [smem:[#allocation3 + %s22]]
      %p238 = scmp.lt.s32.totalorder %s237, 7
      %s239 = scalar_select %p238, %s237, 7
      %s240 = smul.addr %s239, 32
      %s241 = smul.addr %s240, 4
      %s242 = scalar_lea.vmem %s4, %s241
      %p243 = pneg %p125
      %p244 = pneg %p122
      %p245 = pneg %p151
      %p246 = pneg %p148
      %s247 = smul.u32 16, %s22
      %p248 = scmp.lt.s32.totalorder %s247, 191
      %s249 = scalar_select %p248, %s247, 191
      %s250 = smul.addr %s249, 8
      %s251 = scalar_lea.vmem %s5, %s250
      %s252 = smul.u32 16, %s22
      %p253 = scmp.lt.s32.totalorder %s252, 191
      %s254 = scalar_select %p253, %s252, 191
      %s255 = smul.addr %s254, 4
      %s256 = scalar_lea.vmem %s1, %s255
      %s257 = smul.u32 16, %s22
      %s258 = smul.u32 16, %s22
      %p259 = scmp.lt.s32.totalorder %s258, 191
      %s260 = scalar_select %p259, %s258, 191
      %s261 = smul.addr %s260, 8
      %s262 = scalar_lea.vmem %s2, %s261
      %s263 = smul.u32 16, %s22
      %s264 = sld [smem:[#allocation3 + %s22]]
      %p265 = scmp.lt.s32.totalorder %s264, 7
      %s266 = scalar_select %p265, %s264, 7
      %s267 = smul.addr %s266, 64
      %s268 = smul.addr %s267, 4
      %s269 = scalar_lea.vmem %s3, %s268
      %s270 = sld [smem:[#allocation3 + %s22]]
      %s271 = sld [smem:[#allocation3 + %s22]]
      %p272 = scmp.lt.s32.totalorder %s271, 7
      %s273 = scalar_select %p272, %s271, 7
      %s274 = smul.addr %s273, 32
      %s275 = smul.addr %s274, 4
      %s276 = scalar_lea.vmem %s4, %s275
      %s277 = sld [smem:[#allocation3 + %s22]]
      %s278 = smul.u32 16, %s22
      %p279 = scmp.lt.s32.totalorder %s278, 191
      %s280 = scalar_select %p279, %s278, 191
      %s281 = smul.addr %s280, 8
      %s282 = scalar_lea.vmem %s5, %s281
      %s283 = smul.u32 16, %s22
      %v285 = vld [vmem:[%s256] sm:$0xf]
      %v286 = vld [vmem:[%s256 + $0x4] sm:$0xf]
      %v287 = vld [vmem:[%s256 + $0x8] sm:$0xf]
      %v288 = vld [vmem:[%s256 + $0xc] sm:$0xf]
      %v289 = vld [vmem:[%s256 + $0x10] sm:$0xf]
      %v290 = vld [vmem:[%s256 + $0x14] sm:$0xf]
      %v291 = vld [vmem:[%s256 + $0x18] sm:$0xf]
      %v292 = vld [vmem:[%s256 + $0x1c] sm:$0xf]
      %v293 = vld [vmem:[%s256 + $0x20] sm:$0xf]
      %v294 = vld [vmem:[%s256 + $0x24] sm:$0xf]
      %v295 = vld [vmem:[%s256 + $0x28] sm:$0xf]
      %v296 = vld [vmem:[%s256 + $0x2c] sm:$0xf]
      %v297 = vld [vmem:[%s256 + $0x30] sm:$0xf]
      %v298 = vld [vmem:[%s256 + $0x34] sm:$0xf]
      %v299 = vld [vmem:[%s256 + $0x38] sm:$0xf]
      %v300 = vld [vmem:[%s256 + $0x3c] sm:$0xf]
      %v301 = vld [vmem:[%s269] sm:$0xff]
      %v302 = vld [vmem:[%s269 + $0x8] sm:$0xff]
      %v303 = vld [vmem:[%s269 + $0x10] sm:$0xff]
      %v304 = vld [vmem:[%s269 + $0x18] sm:$0xff]
      %v305 = vld [vmem:[%s269 + $0x20] sm:$0xff]
      %v306 = vld [vmem:[%s269 + $0x28] sm:$0xff]
      %v307 = vld [vmem:[%s269 + $0x30] sm:$0xff]
      %v308 = vld [vmem:[%s269 + $0x38] sm:$0xff]
      %v309 = vld [vmem:[%s269 + $0x40] sm:$0xff]
      %v310 = vld [vmem:[%s269 + $0x48] sm:$0xff]
      %v311 = vld [vmem:[%s269 + $0x50] sm:$0xff]
      %v312 = vld [vmem:[%s269 + $0x58] sm:$0xff]
      %v313 = vld [vmem:[%s269 + $0x60] sm:$0xff]
      %v314 = vld [vmem:[%s269 + $0x68] sm:$0xff]
      %v315 = vld [vmem:[%s269 + $0x70] sm:$0xff]
      %v316 = vld [vmem:[%s269 + $0x78] sm:$0xff]
      %v317 = vld [vmem:[%s269 + $0x80] sm:$0xff]
      %v318 = vld [vmem:[%s269 + $0x88] sm:$0xff]
      %v319 = vld [vmem:[%s269 + $0x90] sm:$0xff]
      %v320 = vld [vmem:[%s269 + $0x98] sm:$0xff]
      %v321 = vld [vmem:[%s269 + $0xa0] sm:$0xff]
      %v322 = vld [vmem:[%s269 + $0xa8] sm:$0xff]
      %v323 = vld [vmem:[%s269 + $0xb0] sm:$0xff]
      %v324 = vld [vmem:[%s269 + $0xb8] sm:$0xff]
      %v325 = vld [vmem:[%s269 + $0xc0] sm:$0xff]
      %v326 = vld [vmem:[%s269 + $0xc8] sm:$0xff]
      %v327 = vld [vmem:[%s269 + $0xd0] sm:$0xff]
      %v328 = vld [vmem:[%s269 + $0xd8] sm:$0xff]
      %v329 = vld [vmem:[%s269 + $0xe0] sm:$0xff]
      %v330 = vld [vmem:[%s269 + $0xe8] sm:$0xff]
      %v331 = vld [vmem:[%s269 + $0xf0] sm:$0xff]
      %v332 = vld [vmem:[%s269 + $0xf8] sm:$0xff]
      %v349 = vunpack.c.l.b16 %v285
      %v350 = vunpack.c.l.b16 %v286
      %v351 = vunpack.c.l.b16 %v287
      %v352 = vunpack.c.l.b16 %v288
      %v353 = vunpack.c.l.b16 %v289
      %v354 = vunpack.c.l.b16 %v290
      %v355 = vunpack.c.l.b16 %v291
      %v356 = vunpack.c.l.b16 %v292
      %v357 = vunpack.c.l.b16 %v293
      %v358 = vunpack.c.l.b16 %v294
      %v359 = vunpack.c.l.b16 %v295
      %v360 = vunpack.c.l.b16 %v296
      %v361 = vunpack.c.l.b16 %v297
      %v362 = vunpack.c.l.b16 %v298
      %v363 = vunpack.c.l.b16 %v299
      %v364 = vunpack.c.l.b16 %v300
      %v365 = vpack.c.b16 %v350, %v349
      %v366 = vpack.c.b16 %v352, %v351
      %v367 = vpack.c.b16 %v354, %v353
      %v368 = vpack.c.b16 %v356, %v355
      %v369 = vpack.c.b16 %v358, %v357
      %v370 = vpack.c.b16 %v360, %v359
      %v371 = vpack.c.b16 %v362, %v361
      %v372 = vpack.c.b16 %v364, %v363
      %v413 = vunpack.c.l.b16 %v301
      %v414 = vunpack.c.h.b16 %v301
      %v415 = vunpack.c.l.b16 %v302
      %v416 = vunpack.c.h.b16 %v302
      %v417 = vunpack.c.l.b16 %v303
      %v418 = vunpack.c.h.b16 %v303
      %v419 = vunpack.c.l.b16 %v304
      %v420 = vunpack.c.h.b16 %v304
      %v421 = vunpack.c.l.b16 %v305
      %v422 = vunpack.c.h.b16 %v305
      %v423 = vunpack.c.l.b16 %v306
      %v424 = vunpack.c.h.b16 %v306
      %v425 = vunpack.c.l.b16 %v307
      %v426 = vunpack.c.h.b16 %v307
      %v427 = vunpack.c.l.b16 %v308
      %v428 = vunpack.c.h.b16 %v308
      %v429 = vunpack.c.l.b16 %v309
      %v430 = vunpack.c.h.b16 %v309
      %v431 = vunpack.c.l.b16 %v310
      %v432 = vunpack.c.h.b16 %v310
      %v433 = vunpack.c.l.b16 %v311
      %v434 = vunpack.c.h.b16 %v311
      %v435 = vunpack.c.l.b16 %v312
      %v436 = vunpack.c.h.b16 %v312
      %v437 = vunpack.c.l.b16 %v313
      %v438 = vunpack.c.h.b16 %v313
      %v439 = vunpack.c.l.b16 %v314
      %v440 = vunpack.c.h.b16 %v314
      %v441 = vunpack.c.l.b16 %v315
      %v442 = vunpack.c.h.b16 %v315
      %v443 = vunpack.c.l.b16 %v316
      %v444 = vunpack.c.h.b16 %v316
      %v445 = vunpack.c.l.b16 %v317
      %v446 = vunpack.c.h.b16 %v317
      %v447 = vunpack.c.l.b16 %v318
      %v448 = vunpack.c.h.b16 %v318
      %v449 = vunpack.c.l.b16 %v319
      %v450 = vunpack.c.h.b16 %v319
      %v451 = vunpack.c.l.b16 %v320
      %v452 = vunpack.c.h.b16 %v320
      %v453 = vunpack.c.l.b16 %v321
      %v454 = vunpack.c.h.b16 %v321
      %v455 = vunpack.c.l.b16 %v322
      %v456 = vunpack.c.h.b16 %v322
      %v457 = vunpack.c.l.b16 %v323
      %v458 = vunpack.c.h.b16 %v323
      %v459 = vunpack.c.l.b16 %v324
      %v460 = vunpack.c.h.b16 %v324
      %v461 = vunpack.c.l.b16 %v325
      %v462 = vunpack.c.h.b16 %v325
      %v463 = vunpack.c.l.b16 %v326
      %v464 = vunpack.c.h.b16 %v326
      %v465 = vunpack.c.l.b16 %v327
      %v466 = vunpack.c.h.b16 %v327
      %v467 = vunpack.c.l.b16 %v328
      %v468 = vunpack.c.h.b16 %v328
      %v469 = vunpack.c.l.b16 %v329
      %v470 = vunpack.c.h.b16 %v329
      %v471 = vunpack.c.l.b16 %v330
      %v472 = vunpack.c.h.b16 %v330
      %v473 = vunpack.c.l.b16 %v331
      %v474 = vunpack.c.h.b16 %v331
      %v475 = vunpack.c.l.b16 %v332
      %v476 = vunpack.c.h.b16 %v332
      %v477 = vpack.c.b16 %v417, %v413
      %v478 = vpack.c.b16 %v418, %v414
      %v479 = vpack.c.b16 %v419, %v415
      %v480 = vpack.c.b16 %v420, %v416
      %v481 = vpack.c.b16 %v425, %v421
      %v482 = vpack.c.b16 %v426, %v422
      %v483 = vpack.c.b16 %v427, %v423
      %v484 = vpack.c.b16 %v428, %v424
      %v485 = vpack.c.b16 %v433, %v429
      %v486 = vpack.c.b16 %v434, %v430
      %v487 = vpack.c.b16 %v435, %v431
      %v488 = vpack.c.b16 %v436, %v432
      %v489 = vpack.c.b16 %v441, %v437
      %v490 = vpack.c.b16 %v442, %v438
      %v491 = vpack.c.b16 %v443, %v439
      %v492 = vpack.c.b16 %v444, %v440
      %v493 = vpack.c.b16 %v449, %v445
      %v494 = vpack.c.b16 %v450, %v446
      %v495 = vpack.c.b16 %v451, %v447
      %v496 = vpack.c.b16 %v452, %v448
      %v497 = vpack.c.b16 %v457, %v453
      %v498 = vpack.c.b16 %v458, %v454
      %v499 = vpack.c.b16 %v459, %v455
      %v500 = vpack.c.b16 %v460, %v456
      %v501 = vpack.c.b16 %v465, %v461
      %v502 = vpack.c.b16 %v466, %v462
      %v503 = vpack.c.b16 %v467, %v463
      %v504 = vpack.c.b16 %v468, %v464
      %v505 = vpack.c.b16 %v473, %v469
      %v506 = vpack.c.b16 %v474, %v470
      %v507 = vpack.c.b16 %v475, %v471
      %v508 = vpack.c.b16 %v476, %v472
      %541 = vmatprep.subr.bf16.mxu0 %v506
      %542 = vmatpush1.bf16.msra.mxu0 %v505
      %543 = vmatprep.subr.bf16.mxu0 %v502
      %544 = vmatpush1.bf16.msra.mxu0 %v501
      %545 = vmatprep.subr.bf16.mxu0 %v498
      %546 = vmatpush1.bf16.msra.mxu0 %v497
      %547 = vmatprep.subr.bf16.mxu0 %v494
      %548 = vmatpush1.bf16.msra.mxu0 %v493
      %549 = vmatprep.subr.bf16.mxu0 %v490
      %550 = vmatpush1.bf16.msra.mxu0 %v489
      %551 = vmatprep.subr.bf16.mxu0 %v486
      %552 = vmatpush1.bf16.msra.mxu0 %v485
      %553 = vmatprep.subr.bf16.mxu0 %v482
      %554 = vmatpush1.bf16.msra.mxu0 %v481
      %555 = vmatprep.subr.bf16.mxu0 %v478
      %556 = vmatpush1.bf16.msra.mxu0 %v477
      %557 = vmatprep.subr.bf16.mxu0 0
      %558 = vmatpush2.bf16.msra.mxu0 0
      %559 = vmatprep.subr.bf16.mxu0 0
      %560 = vmatpush2.bf16.msra.mxu0 0
      %561 = vmatprep.subr.bf16.mxu0 0
      %562 = vmatpush2.bf16.msra.mxu0 0
      %563 = vmatprep.subr.bf16.mxu0 0
      %564 = vmatpush2.bf16.msra.mxu0 0
      %565 = vmatprep.subr.bf16.mxu0 0
      %566 = vmatpush2.bf16.msra.mxu0 0
      %567 = vmatprep.subr.bf16.mxu0 0
      %568 = vmatpush2.bf16.msra.mxu0 0
      %569 = vmatprep.subr.bf16.mxu0 0
      %570 = vmatpush2.bf16.msra.mxu0 0
      %571 = vmatprep.subr.bf16.mxu0 0
      %572 = vmatpush2.bf16.msra.mxu0 0
      %573 = vmatprep.mubr.bf16.mxu0 0
      %574 = vmatmul.mubr.bf16.gmra.mxu0 %v365
      %v575 = vpop.f32.mrf.mxu0
      %v576 = vadd.f32 0.0, %v575
      %v577 = vpop.f32.mrf.mxu0
      %v578 = vadd.f32 0.0, %v577
      %v579 = vpop.f32.mrf.mxu0
      %v580 = vadd.f32 0.0, %v579
      %v581 = vpop.f32.mrf.mxu0
      %v582 = vadd.f32 0.0, %v581
      %583 = vmatprep.mubr.bf16.mxu0 0
      %584 = vmatmul.mubr.bf16.gmra.mxu0 %v366
      %v585 = vpop.f32.mrf.mxu0
      %v586 = vadd.f32 0.0, %v585
      %v587 = vpop.f32.mrf.mxu0
      %v588 = vadd.f32 0.0, %v587
      %v589 = vpop.f32.mrf.mxu0
      %v590 = vadd.f32 0.0, %v589
      %v591 = vpop.f32.mrf.mxu0
      %v592 = vadd.f32 0.0, %v591
      %593 = vmatprep.mubr.bf16.mxu0 0
      %594 = vmatmul.mubr.bf16.gmra.mxu0 %v367
      %v595 = vpop.f32.mrf.mxu0
      %v596 = vadd.f32 0.0, %v595
      %v597 = vpop.f32.mrf.mxu0
      %v598 = vadd.f32 0.0, %v597
      %v599 = vpop.f32.mrf.mxu0
      %v600 = vadd.f32 0.0, %v599
      %v601 = vpop.f32.mrf.mxu0
      %v602 = vadd.f32 0.0, %v601
      %603 = vmatprep.mubr.bf16.mxu0 0
      %604 = vmatmul.mubr.bf16.gmra.mxu0 %v368
      %v605 = vpop.f32.mrf.mxu0
      %v606 = vadd.f32 0.0, %v605
      %v607 = vpop.f32.mrf.mxu0
      %v608 = vadd.f32 0.0, %v607
      %v609 = vpop.f32.mrf.mxu0
      %v610 = vadd.f32 0.0, %v609
      %v611 = vpop.f32.mrf.mxu0
      %v612 = vadd.f32 0.0, %v611
      %613 = vmatprep.mubr.bf16.mxu0 0
      %614 = vmatmul.mubr.bf16.gmra.mxu0 %v369
      %v615 = vpop.f32.mrf.mxu0
      %v616 = vadd.f32 0.0, %v615
      %v617 = vpop.f32.mrf.mxu0
      %v618 = vadd.f32 0.0, %v617
      %v619 = vpop.f32.mrf.mxu0
      %v620 = vadd.f32 0.0, %v619
      %v621 = vpop.f32.mrf.mxu0
      %v622 = vadd.f32 0.0, %v621
      %623 = vmatprep.mubr.bf16.mxu0 0
      %624 = vmatmul.mubr.bf16.gmra.mxu0 %v370
      %v625 = vpop.f32.mrf.mxu0
      %v626 = vadd.f32 0.0, %v625
      %v627 = vpop.f32.mrf.mxu0
      %v628 = vadd.f32 0.0, %v627
      %v629 = vpop.f32.mrf.mxu0
      %v630 = vadd.f32 0.0, %v629
      %v631 = vpop.f32.mrf.mxu0
      %v632 = vadd.f32 0.0, %v631
      %633 = vmatprep.mubr.bf16.mxu0 0
      %634 = vmatmul.mubr.bf16.gmra.mxu0 %v371
      %v635 = vpop.f32.mrf.mxu0
      %v636 = vadd.f32 0.0, %v635
      %v637 = vpop.f32.mrf.mxu0
      %v638 = vadd.f32 0.0, %v637
      %v639 = vpop.f32.mrf.mxu0
      %v640 = vadd.f32 0.0, %v639
      %v641 = vpop.f32.mrf.mxu0
      %v642 = vadd.f32 0.0, %v641
      %643 = vmatprep.mubr.bf16.mxu0 0
      %644 = vmatmul.mubr.bf16.gmra.mxu0 %v372
      %v645 = vpop.f32.mrf.mxu0
      %v646 = vadd.f32 0.0, %v645
      %v647 = vpop.f32.mrf.mxu0
      %v648 = vadd.f32 0.0, %v647
      %v649 = vpop.f32.mrf.mxu0
      %v650 = vadd.f32 0.0, %v649
      %v651 = vpop.f32.mrf.mxu0
      %v652 = vadd.f32 0.0, %v651
      %653 = vdwg.mxu0
      %654 = vmatprep.subr.bf16.mxu0 %v508
      %655 = vmatpush1.bf16.msra.mxu0 %v507
      %656 = vmatprep.subr.bf16.mxu0 %v504
      %657 = vmatpush1.bf16.msra.mxu0 %v503
      %658 = vmatprep.subr.bf16.mxu0 %v500
      %659 = vmatpush1.bf16.msra.mxu0 %v499
      %660 = vmatprep.subr.bf16.mxu0 %v496
      %661 = vmatpush1.bf16.msra.mxu0 %v495
      %662 = vmatprep.subr.bf16.mxu0 %v492
      %663 = vmatpush1.bf16.msra.mxu0 %v491
      %664 = vmatprep.subr.bf16.mxu0 %v488
      %665 = vmatpush1.bf16.msra.mxu0 %v487
      %666 = vmatprep.subr.bf16.mxu0 %v484
      %667 = vmatpush1.bf16.msra.mxu0 %v483
      %668 = vmatprep.subr.bf16.mxu0 %v480
      %669 = vmatpush1.bf16.msra.mxu0 %v479
      %670 = vmatprep.subr.bf16.mxu0 0
      %671 = vmatpush2.bf16.msra.mxu0 0
      %672 = vmatprep.subr.bf16.mxu0 0
      %673 = vmatpush2.bf16.msra.mxu0 0
      %674 = vmatprep.subr.bf16.mxu0 0
      %675 = vmatpush2.bf16.msra.mxu0 0
      %676 = vmatprep.subr.bf16.mxu0 0
      %677 = vmatpush2.bf16.msra.mxu0 0
      %678 = vmatprep.subr.bf16.mxu0 0
      %679 = vmatpush2.bf16.msra.mxu0 0
      %680 = vmatprep.subr.bf16.mxu0 0
      %681 = vmatpush2.bf16.msra.mxu0 0
      %682 = vmatprep.subr.bf16.mxu0 0
      %683 = vmatpush2.bf16.msra.mxu0 0
      %684 = vmatprep.subr.bf16.mxu0 0
      %685 = vmatpush2.bf16.msra.mxu0 0
      %686 = vmatprep.mubr.bf16.mxu0 0
      %687 = vmatmul.mubr.bf16.gmra.mxu0 %v365
      %v688 = vpop.f32.mrf.mxu0
      %v689 = vadd.f32 0.0, %v688
      %v690 = vpop.f32.mrf.mxu0
      %v691 = vadd.f32 0.0, %v690
      %v692 = vpop.f32.mrf.mxu0
      %v693 = vadd.f32 0.0, %v692
      %v694 = vpop.f32.mrf.mxu0
      %v695 = vadd.f32 0.0, %v694
      %696 = vmatprep.mubr.bf16.mxu0 0
      %697 = vmatmul.mubr.bf16.gmra.mxu0 %v366
      %v698 = vpop.f32.mrf.mxu0
      %v699 = vadd.f32 0.0, %v698
      %v700 = vpop.f32.mrf.mxu0
      %v701 = vadd.f32 0.0, %v700
      %v702 = vpop.f32.mrf.mxu0
      %v703 = vadd.f32 0.0, %v702
      %v704 = vpop.f32.mrf.mxu0
      %v705 = vadd.f32 0.0, %v704
      %706 = vmatprep.mubr.bf16.mxu0 0
      %707 = vmatmul.mubr.bf16.gmra.mxu0 %v367
      %v708 = vpop.f32.mrf.mxu0
      %v709 = vadd.f32 0.0, %v708
      %v710 = vpop.f32.mrf.mxu0
      %v711 = vadd.f32 0.0, %v710
      %v712 = vpop.f32.mrf.mxu0
      %v713 = vadd.f32 0.0, %v712
      %v714 = vpop.f32.mrf.mxu0
      %v715 = vadd.f32 0.0, %v714
      %716 = vmatprep.mubr.bf16.mxu0 0
      %717 = vmatmul.mubr.bf16.gmra.mxu0 %v368
      %v718 = vpop.f32.mrf.mxu0
      %v719 = vadd.f32 0.0, %v718
      %v720 = vpop.f32.mrf.mxu0
      %v721 = vadd.f32 0.0, %v720
      %v722 = vpop.f32.mrf.mxu0
      %v723 = vadd.f32 0.0, %v722
      %v724 = vpop.f32.mrf.mxu0
      %v725 = vadd.f32 0.0, %v724
      %726 = vmatprep.mubr.bf16.mxu0 0
      %727 = vmatmul.mubr.bf16.gmra.mxu0 %v369
      %v728 = vpop.f32.mrf.mxu0
      %v729 = vadd.f32 0.0, %v728
      %v730 = vpop.f32.mrf.mxu0
      %v731 = vadd.f32 0.0, %v730
      %v732 = vpop.f32.mrf.mxu0
      %v733 = vadd.f32 0.0, %v732
      %v734 = vpop.f32.mrf.mxu0
      %v735 = vadd.f32 0.0, %v734
      %736 = vmatprep.mubr.bf16.mxu0 0
      %737 = vmatmul.mubr.bf16.gmra.mxu0 %v370
      %v738 = vpop.f32.mrf.mxu0
      %v739 = vadd.f32 0.0, %v738
      %v740 = vpop.f32.mrf.mxu0
      %v741 = vadd.f32 0.0, %v740
      %v742 = vpop.f32.mrf.mxu0
      %v743 = vadd.f32 0.0, %v742
      %v744 = vpop.f32.mrf.mxu0
      %v745 = vadd.f32 0.0, %v744
      %746 = vmatprep.mubr.bf16.mxu0 0
      %747 = vmatmul.mubr.bf16.gmra.mxu0 %v371
      %v748 = vpop.f32.mrf.mxu0
      %v749 = vadd.f32 0.0, %v748
      %v750 = vpop.f32.mrf.mxu0
      %v751 = vadd.f32 0.0, %v750
      %v752 = vpop.f32.mrf.mxu0
      %v753 = vadd.f32 0.0, %v752
      %v754 = vpop.f32.mrf.mxu0
      %v755 = vadd.f32 0.0, %v754
      %756 = vmatprep.mubr.bf16.mxu0 0
      %757 = vmatmul.mubr.bf16.gmra.mxu0 %v372
      %v758 = vpop.f32.mrf.mxu0
      %v759 = vadd.f32 0.0, %v758
      %v760 = vpop.f32.mrf.mxu0
      %v761 = vadd.f32 0.0, %v760
      %v762 = vpop.f32.mrf.mxu0
      %v763 = vadd.f32 0.0, %v762
      %v764 = vpop.f32.mrf.mxu0
      %v765 = vadd.f32 0.0, %v764
      %766 = vdwg.mxu0
      %v767 = vxor.u32 %v576, 2147483648
      %v768 = vxor.u32 %v578, 2147483648
      %v769 = vxor.u32 %v580, 2147483648
      %v770 = vxor.u32 %v582, 2147483648
      %v771 = vxor.u32 %v586, 2147483648
      %v772 = vxor.u32 %v588, 2147483648
      %v773 = vxor.u32 %v590, 2147483648
      %v774 = vxor.u32 %v592, 2147483648
      %v775 = vxor.u32 %v596, 2147483648
      %v776 = vxor.u32 %v598, 2147483648
      %v777 = vxor.u32 %v600, 2147483648
      %v778 = vxor.u32 %v602, 2147483648
      %v779 = vxor.u32 %v606, 2147483648
      %v780 = vxor.u32 %v608, 2147483648
      %v781 = vxor.u32 %v610, 2147483648
      %v782 = vxor.u32 %v612, 2147483648
      %v783 = vxor.u32 %v616, 2147483648
      %v784 = vxor.u32 %v618, 2147483648
      %v785 = vxor.u32 %v620, 2147483648
      %v786 = vxor.u32 %v622, 2147483648
      %v787 = vxor.u32 %v626, 2147483648
      %v788 = vxor.u32 %v628, 2147483648
      %v789 = vxor.u32 %v630, 2147483648
      %v790 = vxor.u32 %v632, 2147483648
      %v791 = vxor.u32 %v636, 2147483648
      %v792 = vxor.u32 %v638, 2147483648
      %v793 = vxor.u32 %v640, 2147483648
      %v794 = vxor.u32 %v642, 2147483648
      %v795 = vxor.u32 %v646, 2147483648
      %v796 = vxor.u32 %v648, 2147483648
      %v797 = vxor.u32 %v650, 2147483648
      %v798 = vxor.u32 %v652, 2147483648
      %v799 = vmul.f32 %v767, 1.442695
      %v800 = vpow.pop %v799
      %v801 = vmul.f32 %v768, 1.442695
      %v802 = vpow.pop %v801
      %v803 = vmul.f32 %v769, 1.442695
      %v804 = vpow.pop %v803
      %v805 = vmul.f32 %v770, 1.442695
      %v806 = vpow.pop %v805
      %v807 = vmul.f32 %v771, 1.442695
      %v808 = vpow.pop %v807
      %v809 = vmul.f32 %v772, 1.442695
      %v810 = vpow.pop %v809
      %v811 = vmul.f32 %v773, 1.442695
      %v812 = vpow.pop %v811
      %v813 = vmul.f32 %v774, 1.442695
      %v814 = vpow.pop %v813
      %v815 = vmul.f32 %v775, 1.442695
      %v816 = vpow.pop %v815
      %v817 = vmul.f32 %v776, 1.442695
      %v818 = vpow.pop %v817
      %v819 = vmul.f32 %v777, 1.442695
      %v820 = vpow.pop %v819
      %v821 = vmul.f32 %v778, 1.442695
      %v822 = vpow.pop %v821
      %v823 = vmul.f32 %v779, 1.442695
      %v824 = vpow.pop %v823
      %v825 = vmul.f32 %v780, 1.442695
      %v826 = vpow.pop %v825
      %v827 = vmul.f32 %v781, 1.442695
      %v828 = vpow.pop %v827
      %v829 = vmul.f32 %v782, 1.442695
      %v830 = vpow.pop %v829
      %v831 = vmul.f32 %v783, 1.442695
      %v832 = vpow.pop %v831
      %v833 = vmul.f32 %v784, 1.442695
      %v834 = vpow.pop %v833
      %v835 = vmul.f32 %v785, 1.442695
      %v836 = vpow.pop %v835
      %v837 = vmul.f32 %v786, 1.442695
      %v838 = vpow.pop %v837
      %v839 = vmul.f32 %v787, 1.442695
      %v840 = vpow.pop %v839
      %v841 = vmul.f32 %v788, 1.442695
      %v842 = vpow.pop %v841
      %v843 = vmul.f32 %v789, 1.442695
      %v844 = vpow.pop %v843
      %v845 = vmul.f32 %v790, 1.442695
      %v846 = vpow.pop %v845
      %v847 = vmul.f32 %v791, 1.442695
      %v848 = vpow.pop %v847
      %v849 = vmul.f32 %v792, 1.442695
      %v850 = vpow.pop %v849
      %v851 = vmul.f32 %v793, 1.442695
      %v852 = vpow.pop %v851
      %v853 = vmul.f32 %v794, 1.442695
      %v854 = vpow.pop %v853
      %v855 = vmul.f32 %v795, 1.442695
      %v856 = vpow.pop %v855
      %v857 = vmul.f32 %v796, 1.442695
      %v858 = vpow.pop %v857
      %v859 = vmul.f32 %v797, 1.442695
      %v860 = vpow.pop %v859
      %v861 = vmul.f32 %v798, 1.442695
      %v862 = vpow.pop %v861
      %v863 = vadd.f32 %v800, 1.0
      %v864 = vadd.f32 %v802, 1.0
      %v865 = vadd.f32 %v804, 1.0
      %v866 = vadd.f32 %v806, 1.0
      %v867 = vadd.f32 %v808, 1.0
      %v868 = vadd.f32 %v810, 1.0
      %v869 = vadd.f32 %v812, 1.0
      %v870 = vadd.f32 %v814, 1.0
      %v871 = vadd.f32 %v816, 1.0
      %v872 = vadd.f32 %v818, 1.0
      %v873 = vadd.f32 %v820, 1.0
      %v874 = vadd.f32 %v822, 1.0
      %v875 = vadd.f32 %v824, 1.0
      %v876 = vadd.f32 %v826, 1.0
      %v877 = vadd.f32 %v828, 1.0
      %v878 = vadd.f32 %v830, 1.0
      %v879 = vadd.f32 %v832, 1.0
      %v880 = vadd.f32 %v834, 1.0
      %v881 = vadd.f32 %v836, 1.0
      %v882 = vadd.f32 %v838, 1.0
      %v883 = vadd.f32 %v840, 1.0
      %v884 = vadd.f32 %v842, 1.0
      %v885 = vadd.f32 %v844, 1.0
      %v886 = vadd.f32 %v846, 1.0
      %v887 = vadd.f32 %v848, 1.0
      %v888 = vadd.f32 %v850, 1.0
      %v889 = vadd.f32 %v852, 1.0
      %v890 = vadd.f32 %v854, 1.0
      %v891 = vadd.f32 %v856, 1.0
      %v892 = vadd.f32 %v858, 1.0
      %v893 = vadd.f32 %v860, 1.0
      %v894 = vadd.f32 %v862, 1.0
      %v895 = vrcp.pop %v863
      %v896 = vmul.f32 1.0, %v895
      %v897 = vrcp.pop %v864
      %v898 = vmul.f32 1.0, %v897
      %v899 = vrcp.pop %v865
      %v900 = vmul.f32 1.0, %v899
      %v901 = vrcp.pop %v866
      %v902 = vmul.f32 1.0, %v901
      %v903 = vrcp.pop %v867
      %v904 = vmul.f32 1.0, %v903
      %v905 = vrcp.pop %v868
      %v906 = vmul.f32 1.0, %v905
      %v907 = vrcp.pop %v869
      %v908 = vmul.f32 1.0, %v907
      %v909 = vrcp.pop %v870
      %v910 = vmul.f32 1.0, %v909
      %v911 = vrcp.pop %v871
      %v912 = vmul.f32 1.0, %v911
      %v913 = vrcp.pop %v872
      %v914 = vmul.f32 1.0, %v913
      %v915 = vrcp.pop %v873
      %v916 = vmul.f32 1.0, %v915
      %v917 = vrcp.pop %v874
      %v918 = vmul.f32 1.0, %v917
      %v919 = vrcp.pop %v875
      %v920 = vmul.f32 1.0, %v919
      %v921 = vrcp.pop %v876
      %v922 = vmul.f32 1.0, %v921
      %v923 = vrcp.pop %v877
      %v924 = vmul.f32 1.0, %v923
      %v925 = vrcp.pop %v878
      %v926 = vmul.f32 1.0, %v925
      %v927 = vrcp.pop %v879
      %v928 = vmul.f32 1.0, %v927
      %v929 = vrcp.pop %v880
      %v930 = vmul.f32 1.0, %v929
      %v931 = vrcp.pop %v881
      %v932 = vmul.f32 1.0, %v931
      %v933 = vrcp.pop %v882
      %v934 = vmul.f32 1.0, %v933
      %v935 = vrcp.pop %v883
      %v936 = vmul.f32 1.0, %v935
      %v937 = vrcp.pop %v884
      %v938 = vmul.f32 1.0, %v937
      %v939 = vrcp.pop %v885
      %v940 = vmul.f32 1.0, %v939
      %v941 = vrcp.pop %v886
      %v942 = vmul.f32 1.0, %v941
      %v943 = vrcp.pop %v887
      %v944 = vmul.f32 1.0, %v943
      %v945 = vrcp.pop %v888
      %v946 = vmul.f32 1.0, %v945
      %v947 = vrcp.pop %v889
      %v948 = vmul.f32 1.0, %v947
      %v949 = vrcp.pop %v890
      %v950 = vmul.f32 1.0, %v949
      %v951 = vrcp.pop %v891
      %v952 = vmul.f32 1.0, %v951
      %v953 = vrcp.pop %v892
      %v954 = vmul.f32 1.0, %v953
      %v955 = vrcp.pop %v893
      %v956 = vmul.f32 1.0, %v955
      %v957 = vrcp.pop %v894
      %v958 = vmul.f32 1.0, %v957
      %v959 = vmul.f32 %v576, %v896
      %v960 = vmul.f32 %v578, %v898
      %v961 = vmul.f32 %v580, %v900
      %v962 = vmul.f32 %v582, %v902
      %v963 = vmul.f32 %v586, %v904
      %v964 = vmul.f32 %v588, %v906
      %v965 = vmul.f32 %v590, %v908
      %v966 = vmul.f32 %v592, %v910
      %v967 = vmul.f32 %v596, %v912
      %v968 = vmul.f32 %v598, %v914
      %v969 = vmul.f32 %v600, %v916
      %v970 = vmul.f32 %v602, %v918
      %v971 = vmul.f32 %v606, %v920
      %v972 = vmul.f32 %v608, %v922
      %v973 = vmul.f32 %v610, %v924
      %v974 = vmul.f32 %v612, %v926
      %v975 = vmul.f32 %v616, %v928
      %v976 = vmul.f32 %v618, %v930
      %v977 = vmul.f32 %v620, %v932
      %v978 = vmul.f32 %v622, %v934
      %v979 = vmul.f32 %v626, %v936
      %v980 = vmul.f32 %v628, %v938
      %v981 = vmul.f32 %v630, %v940
      %v982 = vmul.f32 %v632, %v942
      %v983 = vmul.f32 %v636, %v944
      %v984 = vmul.f32 %v638, %v946
      %v985 = vmul.f32 %v640, %v948
      %v986 = vmul.f32 %v642, %v950
      %v987 = vmul.f32 %v646, %v952
      %v988 = vmul.f32 %v648, %v954
      %v989 = vmul.f32 %v650, %v956
      %v990 = vmul.f32 %v652, %v958
      %v991 = vmul.f32 %v959, %v689
      %v992 = vmul.f32 %v960, %v691
      %v993 = vmul.f32 %v961, %v693
      %v994 = vmul.f32 %v962, %v695
      %v995 = vmul.f32 %v963, %v699
      %v996 = vmul.f32 %v964, %v701
      %v997 = vmul.f32 %v965, %v703
      %v998 = vmul.f32 %v966, %v705
      %v999 = vmul.f32 %v967, %v709
      %v1000 = vmul.f32 %v968, %v711
      %v1001 = vmul.f32 %v969, %v713
      %v1002 = vmul.f32 %v970, %v715
      %v1003 = vmul.f32 %v971, %v719
      %v1004 = vmul.f32 %v972, %v721
      %v1005 = vmul.f32 %v973, %v723
      %v1006 = vmul.f32 %v974, %v725
      %v1007 = vmul.f32 %v975, %v729
      %v1008 = vmul.f32 %v976, %v731
      %v1009 = vmul.f32 %v977, %v733
      %v1010 = vmul.f32 %v978, %v735
      %v1011 = vmul.f32 %v979, %v739
      %v1012 = vmul.f32 %v980, %v741
      %v1013 = vmul.f32 %v981, %v743
      %v1014 = vmul.f32 %v982, %v745
      %v1015 = vmul.f32 %v983, %v749
      %v1016 = vmul.f32 %v984, %v751
      %v1017 = vmul.f32 %v985, %v753
      %v1018 = vmul.f32 %v986, %v755
      %v1019 = vmul.f32 %v987, %v759
      %v1020 = vmul.f32 %v988, %v761
      %v1021 = vmul.f32 %v989, %v763
      %v1022 = vmul.f32 %v990, %v765
      %v1023 = vld [vmem:[%s262] sm:$0xff]
      %v1024 = vld [vmem:[%s262 + $0x8] sm:$0xff]
      %v1025 = vld [vmem:[%s262 + $0x10] sm:$0xff]
      %v1026 = vld [vmem:[%s262 + $0x18] sm:$0xff]
      %v1027 = vld [vmem:[%s262 + $0x20] sm:$0xff]
      %v1028 = vld [vmem:[%s262 + $0x28] sm:$0xff]
      %v1029 = vld [vmem:[%s262 + $0x30] sm:$0xff]
      %v1030 = vld [vmem:[%s262 + $0x38] sm:$0xff]
      %v1031 = vld [vmem:[%s262 + $0x40] sm:$0xff]
      %v1032 = vld [vmem:[%s262 + $0x48] sm:$0xff]
      %v1033 = vld [vmem:[%s262 + $0x50] sm:$0xff]
      %v1034 = vld [vmem:[%s262 + $0x58] sm:$0xff]
      %v1035 = vld [vmem:[%s262 + $0x60] sm:$0xff]
      %v1036 = vld [vmem:[%s262 + $0x68] sm:$0xff]
      %v1037 = vld [vmem:[%s262 + $0x70] sm:$0xff]
      %v1038 = vld [vmem:[%s262 + $0x78] sm:$0xff]
      %1040 = vset.pattern.permute.xlu0 0
      %1041 = vperm.xlu0 %1040, %v1023
      %v1042 = vpop.permute.xlu0 %1041
      %1045 = vset.pattern.permute.xlu0 0
      %1046 = vperm.xlu0 %1045, %v1024
      %v1047 = vpop.permute.xlu0 %1046
      %1050 = vset.pattern.permute.xlu0 0
      %1051 = vperm.xlu0 %1050, %v1025
      %v1052 = vpop.permute.xlu0 %1051
      %1055 = vset.pattern.permute.xlu0 0
      %1056 = vperm.xlu0 %1055, %v1026
      %v1057 = vpop.permute.xlu0 %1056
      %1060 = vset.pattern.permute.xlu0 0
      %1061 = vperm.xlu0 %1060, %v1027
      %v1062 = vpop.permute.xlu0 %1061
      %1065 = vset.pattern.permute.xlu0 0
      %1066 = vperm.xlu0 %1065, %v1028
      %v1067 = vpop.permute.xlu0 %1066
      %1070 = vset.pattern.permute.xlu0 0
      %1071 = vperm.xlu0 %1070, %v1029
      %v1072 = vpop.permute.xlu0 %1071
      %1075 = vset.pattern.permute.xlu0 0
      %1076 = vperm.xlu0 %1075, %v1030
      %v1077 = vpop.permute.xlu0 %1076
      %1080 = vset.pattern.permute.xlu0 0
      %1081 = vperm.xlu0 %1080, %v1031
      %v1082 = vpop.permute.xlu0 %1081
      %1085 = vset.pattern.permute.xlu0 0
      %1086 = vperm.xlu0 %1085, %v1032
      %v1087 = vpop.permute.xlu0 %1086
      %1090 = vset.pattern.permute.xlu0 0
      %1091 = vperm.xlu0 %1090, %v1033
      %v1092 = vpop.permute.xlu0 %1091
      %1095 = vset.pattern.permute.xlu0 0
      %1096 = vperm.xlu0 %1095, %v1034
      %v1097 = vpop.permute.xlu0 %1096
      %1100 = vset.pattern.permute.xlu0 0
      %1101 = vperm.xlu0 %1100, %v1035
      %v1102 = vpop.permute.xlu0 %1101
      %1105 = vset.pattern.permute.xlu0 0
      %1106 = vperm.xlu0 %1105, %v1036
      %v1107 = vpop.permute.xlu0 %1106
      %1110 = vset.pattern.permute.xlu0 0
      %1111 = vperm.xlu0 %1110, %v1037
      %v1112 = vpop.permute.xlu0 %1111
      %1115 = vset.pattern.permute.xlu0 0
      %1116 = vperm.xlu0 %1115, %v1038
      %v1117 = vpop.permute.xlu0 %1116
      %v1119 = vmul.f32 %v991, %v1042
      %v1120 = vmul.f32 %v992, %v1042
      %v1121 = vmul.f32 %v993, %v1047
      %v1122 = vmul.f32 %v994, %v1047
      %v1123 = vmul.f32 %v995, %v1052
      %v1124 = vmul.f32 %v996, %v1052
      %v1125 = vmul.f32 %v997, %v1057
      %v1126 = vmul.f32 %v998, %v1057
      %v1127 = vmul.f32 %v999, %v1062
      %v1128 = vmul.f32 %v1000, %v1062
      %v1129 = vmul.f32 %v1001, %v1067
      %v1130 = vmul.f32 %v1002, %v1067
      %v1131 = vmul.f32 %v1003, %v1072
      %v1132 = vmul.f32 %v1004, %v1072
      %v1133 = vmul.f32 %v1005, %v1077
      %v1134 = vmul.f32 %v1006, %v1077
      %v1135 = vmul.f32 %v1007, %v1082
      %v1136 = vmul.f32 %v1008, %v1082
      %v1137 = vmul.f32 %v1009, %v1087
      %v1138 = vmul.f32 %v1010, %v1087
      %v1139 = vmul.f32 %v1011, %v1092
      %v1140 = vmul.f32 %v1012, %v1092
      %v1141 = vmul.f32 %v1013, %v1097
      %v1142 = vmul.f32 %v1014, %v1097
      %v1143 = vmul.f32 %v1015, %v1102
      %v1144 = vmul.f32 %v1016, %v1102
      %v1145 = vmul.f32 %v1017, %v1107
      %v1146 = vmul.f32 %v1018, %v1107
      %v1147 = vmul.f32 %v1019, %v1112
      %v1148 = vmul.f32 %v1020, %v1112
      %v1149 = vmul.f32 %v1021, %v1117
      %v1150 = vmul.f32 %v1022, %v1117
      %v1151 = vpack.c.bf16 %v1121, %v1119
      %v1152 = vpack.c.bf16 %v1122, %v1120
      %v1153 = vpack.c.bf16 %v1125, %v1123
      %v1154 = vpack.c.bf16 %v1126, %v1124
      %v1155 = vpack.c.bf16 %v1129, %v1127
      %v1156 = vpack.c.bf16 %v1130, %v1128
      %v1157 = vpack.c.bf16 %v1133, %v1131
      %v1158 = vpack.c.bf16 %v1134, %v1132
      %v1159 = vpack.c.bf16 %v1137, %v1135
      %v1160 = vpack.c.bf16 %v1138, %v1136
      %v1161 = vpack.c.bf16 %v1141, %v1139
      %v1162 = vpack.c.bf16 %v1142, %v1140
      %v1163 = vpack.c.bf16 %v1145, %v1143
      %v1164 = vpack.c.bf16 %v1146, %v1144
      %v1165 = vpack.c.bf16 %v1149, %v1147
      %v1166 = vpack.c.bf16 %v1150, %v1148
      %v1167 = vld [vmem:[%s276] sm:$0xf]
      %v1168 = vld [vmem:[%s276 + $0x4] sm:$0xf]
      %v1169 = vld [vmem:[%s276 + $0x8] sm:$0xf]
      %v1170 = vld [vmem:[%s276 + $0xc] sm:$0xf]
      %v1171 = vld [vmem:[%s276 + $0x10] sm:$0xf]
      %v1172 = vld [vmem:[%s276 + $0x14] sm:$0xf]
      %v1173 = vld [vmem:[%s276 + $0x18] sm:$0xf]
      %v1174 = vld [vmem:[%s276 + $0x1c] sm:$0xf]
      %v1175 = vld [vmem:[%s276 + $0x20] sm:$0xf]
      %v1176 = vld [vmem:[%s276 + $0x24] sm:$0xf]
      %v1177 = vld [vmem:[%s276 + $0x28] sm:$0xf]
      %v1178 = vld [vmem:[%s276 + $0x2c] sm:$0xf]
      %v1179 = vld [vmem:[%s276 + $0x30] sm:$0xf]
      %v1180 = vld [vmem:[%s276 + $0x34] sm:$0xf]
      %v1181 = vld [vmem:[%s276 + $0x38] sm:$0xf]
      %v1182 = vld [vmem:[%s276 + $0x3c] sm:$0xf]
      %v1183 = vld [vmem:[%s276 + $0x40] sm:$0xf]
      %v1184 = vld [vmem:[%s276 + $0x44] sm:$0xf]
      %v1185 = vld [vmem:[%s276 + $0x48] sm:$0xf]
      %v1186 = vld [vmem:[%s276 + $0x4c] sm:$0xf]
      %v1187 = vld [vmem:[%s276 + $0x50] sm:$0xf]
      %v1188 = vld [vmem:[%s276 + $0x54] sm:$0xf]
      %v1189 = vld [vmem:[%s276 + $0x58] sm:$0xf]
      %v1190 = vld [vmem:[%s276 + $0x5c] sm:$0xf]
      %v1191 = vld [vmem:[%s276 + $0x60] sm:$0xf]
      %v1192 = vld [vmem:[%s276 + $0x64] sm:$0xf]
      %v1193 = vld [vmem:[%s276 + $0x68] sm:$0xf]
      %v1194 = vld [vmem:[%s276 + $0x6c] sm:$0xf]
      %v1195 = vld [vmem:[%s276 + $0x70] sm:$0xf]
      %v1196 = vld [vmem:[%s276 + $0x74] sm:$0xf]
      %v1197 = vld [vmem:[%s276 + $0x78] sm:$0xf]
      %v1198 = vld [vmem:[%s276 + $0x7c] sm:$0xf]
      %v1231 = vunpack.c.l.b16 %v1167
      %v1232 = vunpack.c.l.b16 %v1168
      %v1233 = vunpack.c.l.b16 %v1169
      %v1234 = vunpack.c.l.b16 %v1170
      %v1235 = vunpack.c.l.b16 %v1171
      %v1236 = vunpack.c.l.b16 %v1172
      %v1237 = vunpack.c.l.b16 %v1173
      %v1238 = vunpack.c.l.b16 %v1174
      %v1239 = vunpack.c.l.b16 %v1175
      %v1240 = vunpack.c.l.b16 %v1176
      %v1241 = vunpack.c.l.b16 %v1177
      %v1242 = vunpack.c.l.b16 %v1178
      %v1243 = vunpack.c.l.b16 %v1179
      %v1244 = vunpack.c.l.b16 %v1180
      %v1245 = vunpack.c.l.b16 %v1181
      %v1246 = vunpack.c.l.b16 %v1182
      %v1247 = vunpack.c.l.b16 %v1183
      %v1248 = vunpack.c.l.b16 %v1184
      %v1249 = vunpack.c.l.b16 %v1185
      %v1250 = vunpack.c.l.b16 %v1186
      %v1251 = vunpack.c.l.b16 %v1187
      %v1252 = vunpack.c.l.b16 %v1188
      %v1253 = vunpack.c.l.b16 %v1189
      %v1254 = vunpack.c.l.b16 %v1190
      %v1255 = vunpack.c.l.b16 %v1191
      %v1256 = vunpack.c.l.b16 %v1192
      %v1257 = vunpack.c.l.b16 %v1193
      %v1258 = vunpack.c.l.b16 %v1194
      %v1259 = vunpack.c.l.b16 %v1195
      %v1260 = vunpack.c.l.b16 %v1196
      %v1261 = vunpack.c.l.b16 %v1197
      %v1262 = vunpack.c.l.b16 %v1198
      %v1263 = vpack.c.b16 %v1232, %v1231
      %v1264 = vpack.c.b16 %v1234, %v1233
      %v1265 = vpack.c.b16 %v1236, %v1235
      %v1266 = vpack.c.b16 %v1238, %v1237
      %v1267 = vpack.c.b16 %v1240, %v1239
      %v1268 = vpack.c.b16 %v1242, %v1241
      %v1269 = vpack.c.b16 %v1244, %v1243
      %v1270 = vpack.c.b16 %v1246, %v1245
      %v1271 = vpack.c.b16 %v1248, %v1247
      %v1272 = vpack.c.b16 %v1250, %v1249
      %v1273 = vpack.c.b16 %v1252, %v1251
      %v1274 = vpack.c.b16 %v1254, %v1253
      %v1275 = vpack.c.b16 %v1256, %v1255
      %v1276 = vpack.c.b16 %v1258, %v1257
      %v1277 = vpack.c.b16 %v1260, %v1259
      %v1278 = vpack.c.b16 %v1262, %v1261
      %1295 = vmatprep.subr.bf16.mxu0 0
      %1296 = vmatpush1.bf16.msra.mxu0 %v1270
      %1297 = vmatprep.subr.bf16.mxu0 0
      %1298 = vmatpush1.bf16.msra.mxu0 %v1269
      %1299 = vmatprep.subr.bf16.mxu0 0
      %1300 = vmatpush1.bf16.msra.mxu0 %v1268
      %1301 = vmatprep.subr.bf16.mxu0 0
      %1302 = vmatpush1.bf16.msra.mxu0 %v1267
      %1303 = vmatprep.subr.bf16.mxu0 0
      %1304 = vmatpush1.bf16.msra.mxu0 %v1266
      %1305 = vmatprep.subr.bf16.mxu0 0
      %1306 = vmatpush1.bf16.msra.mxu0 %v1265
      %1307 = vmatprep.subr.bf16.mxu0 0
      %1308 = vmatpush1.bf16.msra.mxu0 %v1264
      %1309 = vmatprep.subr.bf16.mxu0 0
      %1310 = vmatpush1.bf16.msra.mxu0 %v1263
      %1311 = vmatprep.subr.bf16.mxu0 0
      %1312 = vmatpush2.bf16.msra.mxu0 %v1278
      %1313 = vmatprep.subr.bf16.mxu0 0
      %1314 = vmatpush2.bf16.msra.mxu0 %v1277
      %1315 = vmatprep.subr.bf16.mxu0 0
      %1316 = vmatpush2.bf16.msra.mxu0 %v1276
      %1317 = vmatprep.subr.bf16.mxu0 0
      %1318 = vmatpush2.bf16.msra.mxu0 %v1275
      %1319 = vmatprep.subr.bf16.mxu0 0
      %1320 = vmatpush2.bf16.msra.mxu0 %v1274
      %1321 = vmatprep.subr.bf16.mxu0 0
      %1322 = vmatpush2.bf16.msra.mxu0 %v1273
      %1323 = vmatprep.subr.bf16.mxu0 0
      %1324 = vmatpush2.bf16.msra.mxu0 %v1272
      %1325 = vmatprep.subr.bf16.mxu0 0
      %1326 = vmatpush2.bf16.msra.mxu0 %v1271
      %1327 = vmatprep.mubr.bf16.mxu0 %v1152
      %1328 = vmatmul.mubr.bf16.gmra.mxu0 %v1151
      %v1329 = vpop.f32.mrf.mxu0
      %v1330 = vadd.f32 0.0, %v1329
      %v1331 = vpop.f32.mrf.mxu0
      %v1332 = vpop.f32.mrf.mxu0
      %v1333 = vadd.f32 0.0, %v1332
      %v1334 = vpop.f32.mrf.mxu0
      %1335 = vmatprep.mubr.bf16.mxu0 %v1154
      %1336 = vmatmul.mubr.bf16.gmra.mxu0 %v1153
      %v1337 = vpop.f32.mrf.mxu0
      %v1338 = vadd.f32 0.0, %v1337
      %v1339 = vpop.f32.mrf.mxu0
      %v1340 = vpop.f32.mrf.mxu0
      %v1341 = vadd.f32 0.0, %v1340
      %v1342 = vpop.f32.mrf.mxu0
      %1343 = vmatprep.mubr.bf16.mxu0 %v1156
      %1344 = vmatmul.mubr.bf16.gmra.mxu0 %v1155
      %v1345 = vpop.f32.mrf.mxu0
      %v1346 = vadd.f32 0.0, %v1345
      %v1347 = vpop.f32.mrf.mxu0
      %v1348 = vpop.f32.mrf.mxu0
      %v1349 = vadd.f32 0.0, %v1348
      %v1350 = vpop.f32.mrf.mxu0
      %1351 = vmatprep.mubr.bf16.mxu0 %v1158
      %1352 = vmatmul.mubr.bf16.gmra.mxu0 %v1157
      %v1353 = vpop.f32.mrf.mxu0
      %v1354 = vadd.f32 0.0, %v1353
      %v1355 = vpop.f32.mrf.mxu0
      %v1356 = vpop.f32.mrf.mxu0
      %v1357 = vadd.f32 0.0, %v1356
      %v1358 = vpop.f32.mrf.mxu0
      %1359 = vmatprep.mubr.bf16.mxu0 %v1160
      %1360 = vmatmul.mubr.bf16.gmra.mxu0 %v1159
      %v1361 = vpop.f32.mrf.mxu0
      %v1362 = vadd.f32 0.0, %v1361
      %v1363 = vpop.f32.mrf.mxu0
      %v1364 = vpop.f32.mrf.mxu0
      %v1365 = vadd.f32 0.0, %v1364
      %v1366 = vpop.f32.mrf.mxu0
      %1367 = vmatprep.mubr.bf16.mxu0 %v1162
      %1368 = vmatmul.mubr.bf16.gmra.mxu0 %v1161
      %v1369 = vpop.f32.mrf.mxu0
      %v1370 = vadd.f32 0.0, %v1369
      %v1371 = vpop.f32.mrf.mxu0
      %v1372 = vpop.f32.mrf.mxu0
      %v1373 = vadd.f32 0.0, %v1372
      %v1374 = vpop.f32.mrf.mxu0
      %1375 = vmatprep.mubr.bf16.mxu0 %v1164
      %1376 = vmatmul.mubr.bf16.gmra.mxu0 %v1163
      %v1377 = vpop.f32.mrf.mxu0
      %v1378 = vadd.f32 0.0, %v1377
      %v1379 = vpop.f32.mrf.mxu0
      %v1380 = vpop.f32.mrf.mxu0
      %v1381 = vadd.f32 0.0, %v1380
      %v1382 = vpop.f32.mrf.mxu0
      %1383 = vmatprep.mubr.bf16.mxu0 %v1166
      %1384 = vmatmul.mubr.bf16.gmra.mxu0 %v1165
      %v1385 = vpop.f32.mrf.mxu0
      %v1386 = vadd.f32 0.0, %v1385
      %v1387 = vpop.f32.mrf.mxu0
      %v1388 = vpop.f32.mrf.mxu0
      %v1389 = vadd.f32 0.0, %v1388
      %v1390 = vpop.f32.mrf.mxu0
      %1391 = vdwg.mxu0
      %1392 = vst [vmem:[%s282] sm:$0xff] %v1330
      %1393 = vst [vmem:[%s282 + $0x8] sm:$0xff] %v1333
      %1394 = vst [vmem:[%s282 + $0x10] sm:$0xff] %v1338
      %1395 = vst [vmem:[%s282 + $0x18] sm:$0xff] %v1341
      %1396 = vst [vmem:[%s282 + $0x20] sm:$0xff] %v1346
      %1397 = vst [vmem:[%s282 + $0x28] sm:$0xff] %v1349
      %1398 = vst [vmem:[%s282 + $0x30] sm:$0xff] %v1354
      %1399 = vst [vmem:[%s282 + $0x38] sm:$0xff] %v1357
      %1400 = vst [vmem:[%s282 + $0x40] sm:$0xff] %v1362
      %1401 = vst [vmem:[%s282 + $0x48] sm:$0xff] %v1365
      %1402 = vst [vmem:[%s282 + $0x50] sm:$0xff] %v1370
      %1403 = vst [vmem:[%s282 + $0x58] sm:$0xff] %v1373
      %1404 = vst [vmem:[%s282 + $0x60] sm:$0xff] %v1378
      %1405 = vst [vmem:[%s282 + $0x68] sm:$0xff] %v1381
      %1406 = vst [vmem:[%s282 + $0x70] sm:$0xff] %v1386
      %1407 = vst [vmem:[%s282 + $0x78] sm:$0xff] %v1389
      %s1408 = smul.u32 16, %s22
      %p1409 = scmp.lt.s32.totalorder %s1408, 191
      %s1410 = scalar_select %p1409, %s1408, 191
      %s1411 = smul.addr %s1410, 8
      %s1412 = scalar_lea.vmem %s5, %s1411
      // Predicated region
      $region37: #{olmoe_sparse_moe_block.3} parent=35 // pred_check
        %p1413 = pneg %p148
      $region38: #{olmoe_sparse_moe_block.3} parent=35 // pred_check_branch
        %1415 = sbr.rel (%p1413) target = $region40
      $region39: #{olmoe_sparse_moe_block.3} parent=35 // pred_region
        %s1416 = smul.u32 16, %s22
      $region40: #{olmoe_sparse_moe_block.3} parent=35 // pred_fallthru
        _
    $region36: #{olmoe_sparse_moe_block.3} parent=5 // pred_fallthru
      _
    %p1417 = scmp.le.s32.totalorder 2, %s17
    // Predicated region
    $region41: #{olmoe_sparse_moe_block.3} parent=5 // pred_check
      %p1418 = pneg %p1417
    $region42: #{olmoe_sparse_moe_block.3} parent=5 // pred_check_branch
      %1420 = sbr.rel (%p1418) target = $region44
    $region43: #{olmoe_sparse_moe_block.3} parent=5 // pred_region
      %s1421 = ssub.s32 %s17, 2
      // Predicated region
      $region45: #{olmoe_sparse_moe_block.3} parent=43 // pred_check
        %p1422 = pneg %p154
      $region46: #{olmoe_sparse_moe_block.3} parent=43 // pred_check_branch
        %1424 = sbr.rel (%p1422) target = $region48
      $region47: #{olmoe_sparse_moe_block.3} parent=43 // pred_region
        %s1425 = smul.u32 16, %s23
        %p1426 = scmp.lt.s32.totalorder %s1425, 191
        %s1427 = scalar_select %p1426, %s1425, 191
        %s1428 = smul.addr %s1427, 8
        %s1429 = scalar_lea.vmem %s5, %s1428
      $region48: #{olmoe_sparse_moe_block.3} parent=43 // pred_fallthru
        _
    $region44: #{olmoe_sparse_moe_block.3} parent=5 // pred_fallthru
      _
  $region6: #{olmoe_sparse_moe_block.3} parent=0 // loop_footer
    %s21 = sadd.s32 1, %s17
  $region7: #{olmoe_sparse_moe_block.3} parent=0 // loop_footer_branch
    %16 = sbr.rel target = $region3
  $region8: #{olmoe_sparse_moe_block.3} parent=0 // loop_exit
    _

</llo_original>
